<compile_context>
chip_gen: v7x
topology: tpu7x:2x2x1
jax: 0.10.0
libtpu: 0.0.40
codegen_flags: <defaults>
</compile_context>

<pallas_src>
import functools
import math

import jax
import jax.numpy as jnp
from jax.experimental import pallas as pl
from jax.experimental.pallas import tpu as pltpu


# ----------------------------- Pallas kernel -------------------------------
def pointconv_kernel(feat_ref, mask_ref,
                     w1_ref, b1_ref,
                     w2_ref, b2_ref, s2_ref, t2_ref,
                     out_ref, *, tq, k):
    # feat_ref: (TQ*K, FPAD) bf16  gathered [x_j, pos_j - pos_i] per (query, nbr)
    # mask_ref: (TQ, K)      f32   1.0 for valid neighbor, 0.0 otherwise
    # w1/w2:    bf16 weights (BN1 already folded into w2/b2); biases/BN2 in f32.
    feat = feat_ref[...]                                    # (TQ*K, FPAD) bf16

    # layer 1: Linear (MXU, bf16 in / f32 acc) -> bias -> ReLU   (BN1 folded away)
    h = jnp.dot(feat, w1_ref[...],
                preferred_element_type=jnp.float32)         # (TQ*K, H1) f32
    h = jnp.maximum(h + b1_ref[...], 0.0)

    # layer 2: Linear (folded BN1) -> bias -> ReLU -> BN2 (eval: y*s2 + t2)
    h = jnp.dot(h.astype(jnp.bfloat16), w2_ref[...],
                preferred_element_type=jnp.float32)         # (TQ*K, H2) f32
    h = jnp.maximum(h + b2_ref[...], 0.0)
    h = h * s2_ref[...] + t2_ref[...]

    # masked max-aggregation over the neighbor axis (leading-dim split is free)
    h = h.reshape(tq, k, h.shape[-1])                       # (TQ, K, H2)
    mask = mask_ref[...]                                    # (TQ, K)
    h = jnp.where(mask[:, :, None] > 0.5, h, -1e30)
    out_ref[...] = jnp.max(h, axis=1)                       # (TQ, H2)


def pointconv_pallas(feat2d, mask, params, *, tq=256):
    """feat2d: (Q*K, FPAD) bf16, mask: (Q, K) f32 -> (Q, H2) f32."""
    _, fpad = feat2d.shape
    q, k = mask.shape
    w1, b1, w2, b2, s2, t2 = params
    h1 = w1.shape[1]
    h2 = w2.shape[1]

    # --- tile selection: as large as possible (amortize per-step overhead and
    # constant-operand DMAs), but keep >= 2 grid steps when we can so the
    # "parallel" axis shards across the 2 TensorCores on v7x.
    tq_eff = min(tq, q)
    if q > 8 and q // tq_eff < 2:
        tq_eff = -(-q // 2)
    tq_eff = max(8, -(-tq_eff // 8) * 8)                    # sublane multiple
    qpad = pl.cdiv(q, tq_eff) * tq_eff
    if qpad != q:
        feat2d = jnp.pad(feat2d, ((0, (qpad - q) * k), (0, 0)))
        mask = jnp.pad(mask, ((0, qpad - q), (0, 0)))
    grid = qpad // tq_eff

    kernel = functools.partial(pointconv_kernel, tq=tq_eff, k=k)
    out = pl.pallas_call(
        kernel,
        out_shape=jax.ShapeDtypeStruct((qpad, h2), jnp.float32),
        grid=(grid,),
        in_specs=[
            pl.BlockSpec((tq_eff * k, fpad), lambda i: (i, 0)),
            pl.BlockSpec((tq_eff, k), lambda i: (i, 0)),
            pl.BlockSpec((fpad, h1), lambda i: (0, 0)),
            pl.BlockSpec((1, h1), lambda i: (0, 0)),
            pl.BlockSpec((h1, h2), lambda i: (0, 0)),
            pl.BlockSpec((1, h2), lambda i: (0, 0)),
            pl.BlockSpec((1, h2), lambda i: (0, 0)),
            pl.BlockSpec((1, h2), lambda i: (0, 0)),
        ],
        out_specs=pl.BlockSpec((tq_eff, h2), lambda i: (i, 0)),
        compiler_params=pltpu.CompilerParams(
            dimension_semantics=("parallel",),
            vmem_limit_bytes=64 * 1024 * 1024),
    )(feat2d, mask, w1, b1, w2, b2, s2, t2)
    return out[:q]


# ------------------------------ JAX glue ------------------------------------
# TODO(synk): fps / radius-search / neighbor gather are irregular and
# data-dependent; they remain plain-JAX glue rather than Pallas kernels.
def fps_per_batch(pos_b, n_samples):
    """Farthest point sampling for one batch (deterministic start at point 0)."""
    d2_all = jnp.sum((pos_b[:, None, :] - pos_b[None, :, :]) ** 2, axis=-1)

    def body(i, state):
        sel, mind = state
        nxt = jnp.argmax(mind).astype(jnp.int32)
        sel = sel.at[i].set(nxt)
        mind = jnp.minimum(mind, d2_all[nxt])
        return sel, mind

    sel0 = jnp.zeros((n_samples,), jnp.int32)
    mind0 = d2_all[0]
    sel, _ = jax.lax.fori_loop(1, n_samples, body, (sel0, mind0))
    return sel


def radius_dense(pos, batch, qpos, qbatch, r, max_nbrs):
    """Dense radius neighborhoods: returns (nbr_idx [Q,K], mask [Q,K])."""
    d2 = jnp.sum((qpos[:, None, :] - pos[None, :, :]) ** 2, axis=-1)      # (Q,N)
    valid = (d2 <= r * r) & (qbatch[:, None] == batch[None, :])
    order = jnp.argsort((~valid).astype(jnp.int32), axis=1)               # valid first
    nbr_idx = order[:, :max_nbrs]
    counts = jnp.minimum(valid.sum(axis=1), max_nbrs)
    mask = (jnp.arange(max_nbrs)[None, :] < counts[:, None]).astype(jnp.float32)
    return nbr_idx, mask


def sa_module_forward(x, pos, batch, params, *, ratio, r, points_per_batch,
                      max_nbrs=32):
    n_samples = max(1, math.ceil(ratio * points_per_batch))
    num_batches = pos.shape[0] // points_per_batch

    # --- fps (per batch, equal sizes) ---
    pos_batched = pos.reshape(num_batches, points_per_batch, 3)
    local_idx = jax.vmap(functools.partial(fps_per_batch,
                                           n_samples=n_samples))(pos_batched)
    idx = (jnp.arange(num_batches, dtype=jnp.int32)[:, None] * points_per_batch
           + local_idx).reshape(-1)                                        # (Q,)

    qpos = pos[idx]
    qbatch = batch[idx]

    # --- radius neighborhoods + dense gather ---
    nbr_idx, mask = radius_dense(pos, batch, qpos, qbatch, r, max_nbrs)
    nbr_x = x[nbr_idx]                                  # (Q, K, Cin)
    nbr_pos = pos[nbr_idx]                              # (Q, K, 3)
    rel = nbr_pos - qpos[:, None, :]
    feat = jnp.concatenate([nbr_x, rel], axis=-1)       # (Q, K, Cin+3)
    # NOTE: no mask pre-multiply here — invalid slots are finite gathered values
    # and are discarded by the -1e30 masked max inside the kernel.

    fin = feat.shape[-1]
    fpad = ((fin + 7) // 8) * 8
    feat = jnp.pad(feat, ((0, 0), (0, 0), (0, fpad - fin)))
    q, k, _ = feat.shape
    feat2d = feat.reshape(q * k, fpad).astype(jnp.bfloat16)   # flat 2-D MXU operand

    # Fold BN1 (eval affine: y*s1 + t1) into the second linear:
    #   (y*s1 + t1) @ w2 + b2 = y @ (s1.T * w2) + (t1 @ w2 + b2)
    w1, b1, s1, t1, w2, b2, s2, t2 = params
    w2f = w2 * s1.T
    b2f = b2 + t1 @ w2
    kparams = (w1.astype(jnp.bfloat16), b1,
               w2f.astype(jnp.bfloat16), b2f, s2, t2)

    # TODO(synk): for deep SA layers (Cin >> 3) apply the PointConv
    # decomposition (x @ W1[x-rows] once per point, gather H1) — skipped here
    # because Cin(=4) < H1 makes the gathered tensor larger, not smaller.

    # --- PointConv MLP + max aggregation (Pallas kernel) ---
    x_out = pointconv_pallas(feat2d, mask, kparams)
    return x_out, qpos, qbatch


def make_params(key, fin, fpad, h1, h2):
    """Deterministic params for MLP([fin, h1, h2]) with Lin->ReLU->BN layers."""
    ks = jax.random.split(key, 10)

    def bn(kg, kb, dim):
        gamma = 1.0 + 0.1 * jax.random.normal(kg, (1, dim), jnp.float32)
        beta = 0.1 * jax.random.normal(kb, (1, dim), jnp.float32)
        mean = jnp.zeros((1, dim), jnp.float32)        # BN eval-mode running stats
        var = jnp.ones((1, dim), jnp.float32)
        s = gamma / jnp.sqrt(var + 1e-5)
        t = beta - mean * s
        return s, t

    w1 = 0.1 * jax.random.normal(ks[0], (fin, h1), jnp.float32)
    w1 = jnp.pad(w1, ((0, fpad - fin), (0, 0)))        # zero rows for padded feat
    b1 = 0.1 * jax.random.normal(ks[1], (1, h1), jnp.float32)
    s1, t1 = bn(ks[2], ks[3], h1)

    w2 = 0.1 * jax.random.normal(ks[4], (h1, h2), jnp.float32)
    b2 = 0.1 * jax.random.normal(ks[5], (1, h2), jnp.float32)
    s2, t2 = bn(ks[6], ks[7], h2)
    return (w1, b1, s1, t1, w2, b2, s2, t2)


if __name__ == "__main__":
    key = jax.random.PRNGKey(0)
    k_x, k_pos, k_par = jax.random.split(key, 3)

    B, NPER, CIN = 2, 16, 4
    H1, H2 = 32, 32
    RATIO, R = 0.5, 0.5

    N = B * NPER
    x = jax.random.normal(k_x, (N, CIN), jnp.float32)
    pos = jax.random.uniform(k_pos, (N, 3), jnp.float32)
    batch = jnp.repeat(jnp.arange(B, dtype=jnp.int32), NPER)

    FIN = CIN + 3
    FPAD = ((FIN + 7) // 8) * 8
    params = make_params(k_par, FIN, FPAD, H1, H2)

    x_out, pos_out, batch_out = sa_module_forward(
        x, pos, batch, params, ratio=RATIO, r=R, points_per_batch=NPER)

    jax.block_until_ready((x_out, pos_out, batch_out))
    assert x_out.shape == (int(RATIO * NPER) * B, H2)
    assert pos_out.shape == (x_out.shape[0], 3)
    assert bool(jnp.all(jnp.isfinite(x_out)))
    print("KERNEL_OK")
</pallas_src>

<mosaic_0001>
module attributes {stable_mosaic.version = 11 : i64} {
  func.func @pointconv_kernel(%arg0: i32, %arg1: memref<256x8xbf16, #tpu.memory_space<vmem>>, %arg2: memref<8x32xf32, #tpu.memory_space<vmem>>, %arg3: memref<8x32xbf16, #tpu.memory_space<vmem>>, %arg4: memref<1x32xf32, #tpu.memory_space<vmem>>, %arg5: memref<32x32xbf16, #tpu.memory_space<vmem>>, %arg6: memref<1x32xf32, #tpu.memory_space<vmem>>, %arg7: memref<1x32xf32, #tpu.memory_space<vmem>>, %arg8: memref<1x32xf32, #tpu.memory_space<vmem>>, %arg9: memref<8x32xf32, #tpu.memory_space<vmem>>) attributes {dimension_semantics = [#tpu.dimension_semantics<parallel>], iteration_bounds = array<i64: 2>, scalar_prefetch = 0 : i64, scratch_operands = 0 : i64, tpu.core_type = #tpu.core_type<tc>, window_params = [{transform_indices = @transform_0, window_bounds = array<i64: 256, 8>}, {transform_indices = @transform_1, window_bounds = array<i64: 8, 32>}, {pipeline_mode = #tpu.pipeline_mode<synchronous>, transform_indices = @transform_2, window_bounds = array<i64: 8, 32>}, {pipeline_mode = #tpu.pipeline_mode<synchronous>, transform_indices = @transform_3, window_bounds = array<i64: 1, 32>}, {pipeline_mode = #tpu.pipeline_mode<synchronous>, transform_indices = @transform_4, window_bounds = array<i64: 32, 32>}, {pipeline_mode = #tpu.pipeline_mode<synchronous>, transform_indices = @transform_5, window_bounds = array<i64: 1, 32>}, {pipeline_mode = #tpu.pipeline_mode<synchronous>, transform_indices = @transform_6, window_bounds = array<i64: 1, 32>}, {pipeline_mode = #tpu.pipeline_mode<synchronous>, transform_indices = @transform_7, window_bounds = array<i64: 1, 32>}, {transform_indices = @transform_8, window_bounds = array<i64: 8, 32>}]} {
    %c0 = arith.constant 0 : index
    %c0_0 = arith.constant 0 : index
    %0 = vector.load %arg1[%c0, %c0_0] : memref<256x8xbf16, #tpu.memory_space<vmem>>, vector<256x8xbf16>
    %c0_1 = arith.constant 0 : index
    %c0_2 = arith.constant 0 : index
    %1 = vector.load %arg3[%c0_1, %c0_2] : memref<8x32xbf16, #tpu.memory_space<vmem>>, vector<8x32xbf16>
    %cst = arith.constant dense<0.000000e+00> : vector<256x32xf32>
    %2 = tpu.matmul %0, %1, %cst {dimension_numbers = #tpu.dot_dimension_numbers<[1], [0], [0], [1], [0, 0, 1, 1], [], []>} : vector<256x8xbf16>, vector<8x32xbf16>, vector<256x32xf32> -> vector<256x32xf32>
    %c0_3 = arith.constant 0 : index
    %c0_4 = arith.constant 0 : index
    %3 = vector.load %arg4[%c0_3, %c0_4] : memref<1x32xf32, #tpu.memory_space<vmem>>, vector<1x32xf32>
    %4 = vector.broadcast %3 : vector<1x32xf32> to vector<256x32xf32>
    %5 = arith.addf %2, %4 : vector<256x32xf32>
    %cst_5 = arith.constant 0.000000e+00 : f32
    %6 = vector.broadcast %cst_5 : f32 to vector<256x32xf32>
    %7 = arith.maximumf %5, %6 : vector<256x32xf32>
    %8 = arith.truncf %7 : vector<256x32xf32> to vector<256x32xbf16>
    %c0_6 = arith.constant 0 : index
    %c0_7 = arith.constant 0 : index
    %9 = vector.load %arg5[%c0_6, %c0_7] : memref<32x32xbf16, #tpu.memory_space<vmem>>, vector<32x32xbf16>
    %cst_8 = arith.constant dense<0.000000e+00> : vector<256x32xf32>
    %10 = tpu.matmul %8, %9, %cst_8 {dimension_numbers = #tpu.dot_dimension_numbers<[1], [0], [0], [1], [0, 0, 1, 1], [], []>} : vector<256x32xbf16>, vector<32x32xbf16>, vector<256x32xf32> -> vector<256x32xf32>
    %c0_9 = arith.constant 0 : index
    %c0_10 = arith.constant 0 : index
    %11 = vector.load %arg6[%c0_9, %c0_10] : memref<1x32xf32, #tpu.memory_space<vmem>>, vector<1x32xf32>
    %12 = vector.broadcast %11 : vector<1x32xf32> to vector<256x32xf32>
    %13 = arith.addf %10, %12 : vector<256x32xf32>
    %cst_11 = arith.constant 0.000000e+00 : f32
    %14 = vector.broadcast %cst_11 : f32 to vector<256x32xf32>
    %15 = arith.maximumf %13, %14 : vector<256x32xf32>
    %c0_12 = arith.constant 0 : index
    %c0_13 = arith.constant 0 : index
    %16 = vector.load %arg7[%c0_12, %c0_13] : memref<1x32xf32, #tpu.memory_space<vmem>>, vector<1x32xf32>
    %17 = vector.broadcast %16 : vector<1x32xf32> to vector<256x32xf32>
    %18 = arith.mulf %15, %17 : vector<256x32xf32>
    %c0_14 = arith.constant 0 : index
    %c0_15 = arith.constant 0 : index
    %19 = vector.load %arg8[%c0_14, %c0_15] : memref<1x32xf32, #tpu.memory_space<vmem>>, vector<1x32xf32>
    %20 = vector.broadcast %19 : vector<1x32xf32> to vector<256x32xf32>
    %21 = arith.addf %18, %20 : vector<256x32xf32>
    %22 = vector.shape_cast %21 : vector<256x32xf32> to vector<8x32x32xf32>
    %c0_16 = arith.constant 0 : index
    %c0_17 = arith.constant 0 : index
    %23 = vector.load %arg2[%c0_16, %c0_17] : memref<8x32xf32, #tpu.memory_space<vmem>>, vector<8x32xf32>
    %24 = vector.shape_cast %23 : vector<8x32xf32> to vector<8x32x1xf32>
    %cst_18 = arith.constant 5.000000e-01 : f32
    %25 = vector.broadcast %cst_18 : f32 to vector<8x32x1xf32>
    %26 = arith.cmpf ogt, %24, %25 : vector<8x32x1xf32>
    %cst_19 = arith.constant -1.000000e+30 : f32
    %27 = vector.shape_cast %26 : vector<8x32x1xi1> to vector<8x32x1xi1>
    %28 = vector.broadcast %27 : vector<8x32x1xi1> to vector<8x32x32xi1>
    %29 = vector.broadcast %cst_19 : f32 to vector<8x32x32xf32>
    %30 = arith.select %28, %22, %29 : vector<8x32x32xi1>, vector<8x32x32xf32>
    %cst_20 = arith.constant dense<0xFF800000> : vector<8x32xf32>
    %31 = vector.multi_reduction <maximumf>, %30, %cst_20 [1] : vector<8x32x32xf32> to vector<8x32xf32>
    %c0_21 = arith.constant 0 : index
    %c0_22 = arith.constant 0 : index
    %32 = vector.load %arg9[%c0_21, %c0_22] : memref<8x32xf32, #tpu.memory_space<vmem>>, vector<8x32xf32>
    tpu.vector_store %arg9[%c0_21, %c0_22], %31 {strides = array<i32>} : memref<8x32xf32, #tpu.memory_space<vmem>>, vector<8x32xf32>,
    return
  }
  func.func @transform_0(%arg0: i32) -> (i32, i32) {
    %c0_i32 = arith.constant 0 : i32
    %c0_i32_0 = arith.constant 0 : i32
    return %arg0, %c0_i32 : i32, i32
  }
  func.func @transform_1(%arg0: i32) -> (i32, i32) {
    %c0_i32 = arith.constant 0 : i32
    %c0_i32_0 = arith.constant 0 : i32
    return %arg0, %c0_i32 : i32, i32
  }
  func.func @transform_2(%arg0: i32) -> (i32, i32) {
    %c0_i32 = arith.constant 0 : i32
    %c0_i32_0 = arith.constant 0 : i32
    %c0_i32_1 = arith.constant 0 : i32
    return %c0_i32, %c0_i32_0 : i32, i32
  }
  func.func @transform_3(%arg0: i32) -> (i32, i32) {
    %c0_i32 = arith.constant 0 : i32
    %c0_i32_0 = arith.constant 0 : i32
    %c0_i32_1 = arith.constant 0 : i32
    return %c0_i32, %c0_i32_0 : i32, i32
  }
  func.func @transform_4(%arg0: i32) -> (i32, i32) {
    %c0_i32 = arith.constant 0 : i32
    %c0_i32_0 = arith.constant 0 : i32
    %c0_i32_1 = arith.constant 0 : i32
    return %c0_i32, %c0_i32_0 : i32, i32
  }
  func.func @transform_5(%arg0: i32) -> (i32, i32) {
    %c0_i32 = arith.constant 0 : i32
    %c0_i32_0 = arith.constant 0 : i32
    %c0_i32_1 = arith.constant 0 : i32
    return %c0_i32, %c0_i32_0 : i32, i32
  }
  func.func @transform_6(%arg0: i32) -> (i32, i32) {
    %c0_i32 = arith.constant 0 : i32
    %c0_i32_0 = arith.constant 0 : i32
    %c0_i32_1 = arith.constant 0 : i32
    return %c0_i32, %c0_i32_0 : i32, i32
  }
  func.func @transform_7(%arg0: i32) -> (i32, i32) {
    %c0_i32 = arith.constant 0 : i32
    %c0_i32_0 = arith.constant 0 : i32
    %c0_i32_1 = arith.constant 0 : i32
    return %c0_i32, %c0_i32_0 : i32, i32
  }
  func.func @transform_8(%arg0: i32) -> (i32, i32) {
    %c0_i32 = arith.constant 0 : i32
    %c0_i32_0 = arith.constant 0 : i32
    return %arg0, %c0_i32 : i32, i32
  }
}

</mosaic_0001>

<llo_original>
// kernel: tpu_custom_call.1
$region0: #{tpu_custom_call.1}
  #allocation0 [shape = 'u32[]', space=smem, size = 0x4, offset = 0x4, fixed_abs, tag = 'smem constant byte address 0x4 - core index']
  #allocation1 [shape = 'u32[144,128]{1,0:T(1,128)}', space=vmem, size = 0x12000, scoped, tag = 'internal scratch']
  %s0 = inlined_call_operand.hbm [shape: bf16[512,8], index: 0, kind: input, shape index: {}]
  %s1 = inlined_call_operand.hbm [shape: f32[16,32], index: 1, kind: input, shape index: {}]
  %s2 = inlined_call_operand.hbm [shape: bf16[8,32], index: 2, kind: input, shape index: {}]
  %s3 = inlined_call_operand.hbm [shape: f32[1,32], index: 3, kind: input, shape index: {}]
  %s4 = inlined_call_operand.hbm [shape: bf16[32,32], index: 4, kind: input, shape index: {}]
  %s5 = inlined_call_operand.hbm [shape: f32[1,32], index: 5, kind: input, shape index: {}]
  %s6 = inlined_call_operand.hbm [shape: f32[1,32], index: 6, kind: input, shape index: {}]
  %s7 = inlined_call_operand.hbm [shape: f32[1,32], index: 7, kind: input, shape index: {}]
  %s8 = inlined_call_operand.hbm [shape: f32[16,32], index: 8, kind: output, shape index: {}]
  %s9 = sld [smem:[#allocation0]]
  $region97: #{tpu_custom_call.1} parent=0
    _
  %s11 = ssub.s32 1, %s9
  %s12 = scalar_select 0, %s11, %s9
  $region1: #{tpu_custom_call.1} parent=0
    #allocation2 [shape = 'u8[131072]{0}', space=vmem, size = 0x20000, scoped, tag = 'input window, operand 0']
    #allocation3 [shape = 's32[2]{0}', space=sflag, size = 0x8, scoped, tag = 'scoped memory for tpu_custom_call.1']
    #allocation4 [shape = 's32[2]{0}', space=sflag, size = 0x8, scoped, tag = 'scoped memory for tpu_custom_call.1']
    #allocation5 [shape = 'u8[8192]{0}', space=vmem, size = 0x2000, scoped, tag = 'input window, operand 1']
    #allocation6 [shape = 's32[2]{0}', space=sflag, size = 0x8, scoped, tag = 'scoped memory for tpu_custom_call.1']
    #allocation7 [shape = 'u8[2048]{0}', space=vmem, size = 0x800, scoped, tag = 'input window, operand 2, single buffered']
    #allocation8 [shape = 'u8[512]{0}', space=vmem, size = 0x400, scoped, tag = 'input window, operand 3, single buffered']
    #allocation9 [shape = 's32[1]{0}', space=sflag, size = 0x4, scoped, tag = 'scoped memory for tpu_custom_call.1']
    #allocation10 [shape = 'u8[8192]{0}', space=vmem, size = 0x2000, scoped, tag = 'input window, operand 4, single buffered']
    #allocation11 [shape = 'u8[512]{0}', space=vmem, size = 0x400, scoped, tag = 'input window, operand 5, single buffered']
    #allocation12 [shape = 's32[1]{0}', space=sflag, size = 0x4, scoped, tag = 'scoped memory for tpu_custom_call.1']
    #allocation13 [shape = 'u8[512]{0}', space=vmem, size = 0x400, scoped, tag = 'input window, operand 6, single buffered']
    #allocation14 [shape = 'u8[512]{0}', space=vmem, size = 0x400, scoped, tag = 'input window, operand 7, single buffered']
    #allocation15 [shape = 's32[1]{0}', space=sflag, size = 0x4, scoped, tag = 'scoped memory for tpu_custom_call.1']
    #allocation16 [shape = 'u8[8192]{0}', space=vmem, size = 0x2000, scoped, tag = 'output window, operand 0']
    %13 = vsyncpa [#allocation3], 0
    %s14 = scalar_lea.sflag [#allocation3], 1
    %15 = vsyncpa %s14, 0
    %16 = vsyncpa [#allocation6], 0
    %s17 = scalar_lea.sflag [#allocation6], 1
    %18 = vsyncpa %s17, 0
    %19 = vsyncpa [#allocation9], 0
    %20 = vsyncpa [#allocation12], 0
    %21 = vsyncpa [#allocation15], 0
    %22 = vsyncpa [#allocation4], 0
    %s23 = scalar_lea.sflag [#allocation4], 1
    %24 = vsyncpa %s23, 0
    loop: start=0, step=1, limit=4
    $region2: #{tpu_custom_call.1} parent=1 // loop_pre_header
      _
    $region3: #{tpu_custom_call.1} parent=1 // loop_header
      %s26 = sphi 0, %s30
      %p27 = scmp.ge.s32.totalorder %s26, 4
      %s36 = sphi 0, %s38
      %s39 = sphi 0, %s36
      %s40 = sphi 0, %s39
      %s56 = sphi 0, %s40
      %s62 = sphi 0, %s64
      %s65 = sphi 0, %s62
      %s66 = sphi 0, %s65
      %s82 = sphi 0, %s66
      %s86 = sphi 0, %s86
      %s88 = sphi 0, %s86
      %s89 = sphi 0, %s88
      %s103 = sphi 0, %s89
      %s107 = sphi 0, %s107
      %s109 = sphi 0, %s107
      %s110 = sphi 0, %s109
      %s124 = sphi 0, %s110
      %s128 = sphi 0, %s128
      %s130 = sphi 0, %s128
      %s131 = sphi 0, %s130
      %s145 = sphi 0, %s131
      %s149 = sphi 0, %s149
      %s151 = sphi 0, %s149
      %s152 = sphi 0, %s151
      %s166 = sphi 0, %s152
      %s170 = sphi 0, %s170
      %s172 = sphi 0, %s170
      %s173 = sphi 0, %s172
      %s187 = sphi 0, %s173
      %s191 = sphi 0, %s191
      %s193 = sphi 0, %s191
      %s194 = sphi 0, %s193
      %s208 = sphi 0, %s194
      %s214 = sphi 0, %s216
      %s217 = sphi 0, %s214
      %s218 = sphi 0, %s217
      %s234 = sphi 0, %s218
    $region4: #{tpu_custom_call.1} parent=1 // loop_header_branch
      %29 = sbr.rel (%p27) target = $region8
    $region5: #{tpu_custom_call.1} parent=1 // loop_body
      %s31 = ssub.s32 %s26, 1
      %s32 = ssub.s32 %s26, 2
      %s33 = sadd.s32 %s26, 1
      %s34 = ssub.s32 %s26, %s33
      %p35 = scmp.eq.s32.totalorder %s34, 0
      %s37 = sadd.s32 %s36, 1
      %s38 = scalar_select %p35, %s36, %s37
      %p41 = pneg %p35
      %p42 = scmp.eq.s32.totalorder %s26, 1
      %p43 = por %p41, %p42
      %p44 = scmp.ne.s32.totalorder %s36, %s39
      %p45 = scmp.eq.s32.totalorder %s26, 0
      %p46 = por %p44, %p45
      %p47 = scmp.ne.s32.totalorder %s36, %s39
      %p48 = scmp.eq.s32.totalorder %s31, 1
      %p49 = por %p47, %p48
      %p50 = scmp.ne.s32.totalorder %s39, %s40
      %p51 = scmp.eq.s32.totalorder %s31, 0
      %p52 = por %p50, %p51
      %p53 = scmp.ne.s32.totalorder %s39, %s40
      %p54 = scmp.eq.s32.totalorder %s32, 1
      %p55 = por %p53, %p54
      %p57 = scmp.ne.s32.totalorder %s40, %s56
      %p58 = scmp.eq.s32.totalorder %s32, 0
      %p59 = por %p57, %p58
      %s60 = ssub.s32 %s26, %s33
      %p61 = scmp.eq.s32.totalorder %s60, 0
      %s63 = sadd.s32 %s62, 1
      %s64 = scalar_select %p61, %s62, %s63
      %p67 = pneg %p61
      %p68 = scmp.eq.s32.totalorder %s26, 1
      %p69 = por %p67, %p68
      %p70 = scmp.ne.s32.totalorder %s62, %s65
      %p71 = scmp.eq.s32.totalorder %s26, 0
      %p72 = por %p70, %p71
      %p73 = scmp.ne.s32.totalorder %s62, %s65
      %p74 = scmp.eq.s32.totalorder %s31, 1
      %p75 = por %p73, %p74
      %p76 = scmp.ne.s32.totalorder %s65, %s66
      %p77 = scmp.eq.s32.totalorder %s31, 0
      %p78 = por %p76, %p77
      %p79 = scmp.ne.s32.totalorder %s65, %s66
      %p80 = scmp.eq.s32.totalorder %s32, 1
      %p81 = por %p79, %p80
      %p83 = scmp.ne.s32.totalorder %s66, %s82
      %p84 = scmp.eq.s32.totalorder %s32, 0
      %p85 = por %p83, %p84
      %s87 = sadd.s32 %s86, 1
      %p90 = scmp.eq.s32.totalorder %s26, 1
      %p91 = scmp.ne.s32.totalorder %s86, %s88
      %p92 = scmp.eq.s32.totalorder %s26, 0
      %p93 = por %p91, %p92
      %p94 = scmp.ne.s32.totalorder %s86, %s88
      %p95 = scmp.eq.s32.totalorder %s31, 1
      %p96 = por %p94, %p95
      %p97 = scmp.ne.s32.totalorder %s88, %s89
      %p98 = scmp.eq.s32.totalorder %s31, 0
      %p99 = por %p97, %p98
      %p100 = scmp.ne.s32.totalorder %s88, %s89
      %p101 = scmp.eq.s32.totalorder %s32, 1
      %p102 = por %p100, %p101
      %p104 = scmp.ne.s32.totalorder %s89, %s103
      %p105 = scmp.eq.s32.totalorder %s32, 0
      %p106 = por %p104, %p105
      %s108 = sadd.s32 %s107, 1
      %p111 = scmp.eq.s32.totalorder %s26, 1
      %p112 = scmp.ne.s32.totalorder %s107, %s109
      %p113 = scmp.eq.s32.totalorder %s26, 0
      %p114 = por %p112, %p113
      %p115 = scmp.ne.s32.totalorder %s107, %s109
      %p116 = scmp.eq.s32.totalorder %s31, 1
      %p117 = por %p115, %p116
      %p118 = scmp.ne.s32.totalorder %s109, %s110
      %p119 = scmp.eq.s32.totalorder %s31, 0
      %p120 = por %p118, %p119
      %p121 = scmp.ne.s32.totalorder %s109, %s110
      %p122 = scmp.eq.s32.totalorder %s32, 1
      %p123 = por %p121, %p122
      %p125 = scmp.ne.s32.totalorder %s110, %s124
      %p126 = scmp.eq.s32.totalorder %s32, 0
      %p127 = por %p125, %p126
      %s129 = sadd.s32 %s128, 1
      %p132 = scmp.eq.s32.totalorder %s26, 1
      %p133 = scmp.ne.s32.totalorder %s128, %s130
      %p134 = scmp.eq.s32.totalorder %s26, 0
      %p135 = por %p133, %p134
      %p136 = scmp.ne.s32.totalorder %s128, %s130
      %p137 = scmp.eq.s32.totalorder %s31, 1
      %p138 = por %p136, %p137
      %p139 = scmp.ne.s32.totalorder %s130, %s131
      %p140 = scmp.eq.s32.totalorder %s31, 0
      %p141 = por %p139, %p140
      %p142 = scmp.ne.s32.totalorder %s130, %s131
      %p143 = scmp.eq.s32.totalorder %s32, 1
      %p144 = por %p142, %p143
      %p146 = scmp.ne.s32.totalorder %s131, %s145
      %p147 = scmp.eq.s32.totalorder %s32, 0
      %p148 = por %p146, %p147
      %s150 = sadd.s32 %s149, 1
      %p153 = scmp.eq.s32.totalorder %s26, 1
      %p154 = scmp.ne.s32.totalorder %s149, %s151
      %p155 = scmp.eq.s32.totalorder %s26, 0
      %p156 = por %p154, %p155
      %p157 = scmp.ne.s32.totalorder %s149, %s151
      %p158 = scmp.eq.s32.totalorder %s31, 1
      %p159 = por %p157, %p158
      %p160 = scmp.ne.s32.totalorder %s151, %s152
      %p161 = scmp.eq.s32.totalorder %s31, 0
      %p162 = por %p160, %p161
      %p163 = scmp.ne.s32.totalorder %s151, %s152
      %p164 = scmp.eq.s32.totalorder %s32, 1
      %p165 = por %p163, %p164
      %p167 = scmp.ne.s32.totalorder %s152, %s166
      %p168 = scmp.eq.s32.totalorder %s32, 0
      %p169 = por %p167, %p168
      %s171 = sadd.s32 %s170, 1
      %p174 = scmp.eq.s32.totalorder %s26, 1
      %p175 = scmp.ne.s32.totalorder %s170, %s172
      %p176 = scmp.eq.s32.totalorder %s26, 0
      %p177 = por %p175, %p176
      %p178 = scmp.ne.s32.totalorder %s170, %s172
      %p179 = scmp.eq.s32.totalorder %s31, 1
      %p180 = por %p178, %p179
      %p181 = scmp.ne.s32.totalorder %s172, %s173
      %p182 = scmp.eq.s32.totalorder %s31, 0
      %p183 = por %p181, %p182
      %p184 = scmp.ne.s32.totalorder %s172, %s173
      %p185 = scmp.eq.s32.totalorder %s32, 1
      %p186 = por %p184, %p185
      %p188 = scmp.ne.s32.totalorder %s173, %s187
      %p189 = scmp.eq.s32.totalorder %s32, 0
      %p190 = por %p188, %p189
      %s192 = sadd.s32 %s191, 1
      %p195 = scmp.eq.s32.totalorder %s26, 1
      %p196 = scmp.ne.s32.totalorder %s191, %s193
      %p197 = scmp.eq.s32.totalorder %s26, 0
      %p198 = por %p196, %p197
      %p199 = scmp.ne.s32.totalorder %s191, %s193
      %p200 = scmp.eq.s32.totalorder %s31, 1
      %p201 = por %p199, %p200
      %p202 = scmp.ne.s32.totalorder %s193, %s194
      %p203 = scmp.eq.s32.totalorder %s31, 0
      %p204 = por %p202, %p203
      %p205 = scmp.ne.s32.totalorder %s193, %s194
      %p206 = scmp.eq.s32.totalorder %s32, 1
      %p207 = por %p205, %p206
      %p209 = scmp.ne.s32.totalorder %s194, %s208
      %p210 = scmp.eq.s32.totalorder %s32, 0
      %p211 = por %p209, %p210
      %s212 = ssub.s32 %s26, %s33
      %p213 = scmp.eq.s32.totalorder %s212, 0
      %s215 = sadd.s32 %s214, 1
      %s216 = scalar_select %p213, %s214, %s215
      %p219 = pneg %p213
      %p220 = scmp.eq.s32.totalorder %s26, 1
      %p221 = por %p219, %p220
      %p222 = scmp.ne.s32.totalorder %s214, %s217
      %p223 = scmp.eq.s32.totalorder %s26, 0
      %p224 = por %p222, %p223
      %p225 = scmp.ne.s32.totalorder %s214, %s217
      %p226 = scmp.eq.s32.totalorder %s31, 1
      %p227 = por %p225, %p226
      %p228 = scmp.ne.s32.totalorder %s217, %s218
      %p229 = scmp.eq.s32.totalorder %s31, 0
      %p230 = por %p228, %p229
      %p231 = scmp.ne.s32.totalorder %s217, %s218
      %p232 = scmp.eq.s32.totalorder %s32, 1
      %p233 = por %p231, %p232
      %p235 = scmp.ne.s32.totalorder %s218, %s234
      %p236 = scmp.eq.s32.totalorder %s32, 0
      %p237 = por %p235, %p236
      %p238 = scmp.le.s32.totalorder 1, %s26
      %p239 = scmp.lt.s32.totalorder %s26, 3
      %p240 = pnand %p238, %p239
      %p241 = pneg %p240
      // Predicated region
      $region9: #{tpu_custom_call.1} parent=5 // pred_check
        _
      $region10: #{tpu_custom_call.1} parent=5 // pred_check_branch
        %243 = sbr.rel (%p240) target = $region12
      $region11: #{tpu_custom_call.1} parent=5 // pred_region
        %s244 = ssub.s32 %s26, 1
        // Predicated region
        $region13: #{tpu_custom_call.1} parent=11 // pred_check
          %p245 = pneg %p99
        $region14: #{tpu_custom_call.1} parent=11 // pred_check_branch
          %247 = sbr.rel (%p245) target = $region16
        $region15: #{tpu_custom_call.1} parent=11 // pred_region
          %s249 = ssub.s32 64, 64
          %250 = vsyncadd [#allocation6], %s249
          %s252 = sshll.u32 [#allocation7], 4
          %s253 = int_to_ptr.vmem [resolvable:$true] %s252
          %255 = dma.hbm_to_vmem [thread:$0]  %s2, 64, %s253, [#allocation6]
        $region16: #{tpu_custom_call.1} parent=11 // pred_fallthru
          _
        // Predicated region
        $region17: #{tpu_custom_call.1} parent=11 // pred_check
          %p256 = pneg %p120
        $region18: #{tpu_custom_call.1} parent=11 // pred_check_branch
          %258 = sbr.rel (%p256) target = $region20
        $region19: #{tpu_custom_call.1} parent=11 // pred_region
          %s260 = ssub.s32 16, 16
          %261 = vsyncadd [#allocation9], %s260
          %s263 = sshll.u32 [#allocation8], 4
          %s264 = int_to_ptr.vmem [resolvable:$true] %s263
          %266 = dma.hbm_to_vmem [thread:$0]  %s3, 16, %s264, [#allocation9]
        $region20: #{tpu_custom_call.1} parent=11 // pred_fallthru
          _
        // Predicated region
        $region21: #{tpu_custom_call.1} parent=11 // pred_check
          %p267 = pneg %p141
        $region22: #{tpu_custom_call.1} parent=11 // pred_check_branch
          %269 = sbr.rel (%p267) target = $region24
        $region23: #{tpu_custom_call.1} parent=11 // pred_region
          %s271 = ssub.s32 256, 256
          %272 = vsyncadd [#allocation9], %s271
          %s273 = sshll.u32 [#allocation10], 4
          %s274 = int_to_ptr.vmem [resolvable:$true] %s273
          %279 = dma.hbm_to_vmem [thread:$0]  %s4, 256, %s274, [#allocation9], 64, 64, 4
        $region24: #{tpu_custom_call.1} parent=11 // pred_fallthru
          _
        // Predicated region
        $region25: #{tpu_custom_call.1} parent=11 // pred_check
          %p280 = pneg %p162
        $region26: #{tpu_custom_call.1} parent=11 // pred_check_branch
          %282 = sbr.rel (%p280) target = $region28
        $region27: #{tpu_custom_call.1} parent=11 // pred_region
          %s284 = ssub.s32 16, 16
          %285 = vsyncadd [#allocation12], %s284
          %s287 = sshll.u32 [#allocation11], 4
          %s288 = int_to_ptr.vmem [resolvable:$true] %s287
          %290 = dma.hbm_to_vmem [thread:$0]  %s5, 16, %s288, [#allocation12]
        $region28: #{tpu_custom_call.1} parent=11 // pred_fallthru
          _
        // Predicated region
        $region29: #{tpu_custom_call.1} parent=11 // pred_check
          %p291 = pneg %p183
        $region30: #{tpu_custom_call.1} parent=11 // pred_check_branch
          %293 = sbr.rel (%p291) target = $region32
        $region31: #{tpu_custom_call.1} parent=11 // pred_region
          %s295 = ssub.s32 16, 16
          %296 = vsyncadd [#allocation12], %s295
          %s298 = sshll.u32 [#allocation13], 4
          %s299 = int_to_ptr.vmem [resolvable:$true] %s298
          %301 = dma.hbm_to_vmem [thread:$0]  %s6, 16, %s299, [#allocation12]
        $region32: #{tpu_custom_call.1} parent=11 // pred_fallthru
          _
        // Predicated region
        $region33: #{tpu_custom_call.1} parent=11 // pred_check
          %p302 = pneg %p204
        $region34: #{tpu_custom_call.1} parent=11 // pred_check_branch
          %304 = sbr.rel (%p302) target = $region36
        $region35: #{tpu_custom_call.1} parent=11 // pred_region
          %s306 = ssub.s32 16, 16
          %307 = vsyncadd [#allocation15], %s306
          %s309 = sshll.u32 [#allocation14], 4
          %s310 = int_to_ptr.vmem [resolvable:$true] %s309
          %312 = dma.hbm_to_vmem [thread:$0]  %s7, 16, %s310, [#allocation15]
        $region36: #{tpu_custom_call.1} parent=11 // pred_fallthru
          _
      $region12: #{tpu_custom_call.1} parent=5 // pred_fallthru
        _
      %p313 = scmp.lt.s32.totalorder %s26, 2
      // Predicated region
      $region37: #{tpu_custom_call.1} parent=5 // pred_check
        %p314 = pneg %p313
      $region38: #{tpu_custom_call.1} parent=5 // pred_check_branch
        %316 = sbr.rel (%p314) target = $region40
      $region39: #{tpu_custom_call.1} parent=5 // pred_region
        // Predicated region
        $region41: #{tpu_custom_call.1} parent=39 // pred_check
          %p317 = pneg %p46
        $region42: #{tpu_custom_call.1} parent=39 // pred_check_branch
          %319 = sbr.rel (%p317) target = $region44
        $region43: #{tpu_custom_call.1} parent=39 // pred_region
          %s320 = sand.u32 %s36, 1
          %s321 = scalar_lea.sflag [#allocation3], %s320
          %s322 = sand.u32 %s36, 1
          %s323 = smul.addr %s322, 128
          %s324 = scalar_lea.vmem [#allocation2], %s323
          %s325 = smul.u32 32, %s26
          %s327 = ssub.s32 2048, 2048
          %328 = vsyncadd %s321, %s327
          %s329 = smul.addr %s325, 64
          %s330 = scalar_lea.hbm %s0, %s329
          %s331 = sshll.u32 %s324, 4
          %s332 = int_to_ptr.vmem [resolvable:$true] %s331
          %337 = dma.hbm_to_vmem [thread:$0]  %s330, 2048, %s332, %s321, 64, 64, 4
        $region44: #{tpu_custom_call.1} parent=39 // pred_fallthru
          _
        // Predicated region
        $region45: #{tpu_custom_call.1} parent=39 // pred_check
          %p338 = pneg %p72
        $region46: #{tpu_custom_call.1} parent=39 // pred_check_branch
          %340 = sbr.rel (%p338) target = $region48
        $region47: #{tpu_custom_call.1} parent=39 // pred_region
          %s341 = sand.u32 %s26, 1
          %s342 = scalar_lea.sflag [#allocation6], %s341
          %s343 = sand.u32 %s62, 1
          %s344 = smul.addr %s343, 8
          %s345 = scalar_lea.vmem [#allocation5], %s344
          %s347 = ssub.s32 128, 128
          %348 = vsyncadd %s342, %s347
          %s349 = smul.addr %s26, 128
          %s350 = scalar_lea.hbm %s1, %s349
          %s352 = sshll.u32 %s345, 4
          %s353 = int_to_ptr.vmem [resolvable:$true] %s352
          %355 = dma.hbm_to_vmem [thread:$0]  %s350, 128, %s353, %s342
        $region48: #{tpu_custom_call.1} parent=39 // pred_fallthru
          _
      $region40: #{tpu_custom_call.1} parent=5 // pred_fallthru
        _
      %p356 = scmp.le.s32.totalorder 1, %s26
      %p357 = scmp.lt.s32.totalorder %s26, 3
      %p358 = pnand %p356, %p357
      %p359 = pneg %p358
      // Predicated region
      $region49: #{tpu_custom_call.1} parent=5 // pred_check
        _
      $region50: #{tpu_custom_call.1} parent=5 // pred_check_branch
        %361 = sbr.rel (%p358) target = $region52
      $region51: #{tpu_custom_call.1} parent=5 // pred_region
        %s362 = ssub.s32 %s26, 1
        %s363 = sand.u32 %s39, 1
        %s364 = scalar_lea.sflag [#allocation3], %s363
        %s365 = sand.u32 %s39, 1
        %s366 = smul.addr %s365, 128
        %s367 = scalar_lea.vmem [#allocation2], %s366
        // Predicated region
        $region53: #{tpu_custom_call.1} parent=51 // pred_check
          %p368 = pneg %p52
        $region54: #{tpu_custom_call.1} parent=51 // pred_check_branch
          %370 = sbr.rel (%p368) target = $region56
        $region55: #{tpu_custom_call.1} parent=51 // pred_region
          %371 = dma.done %s364, 2048
        $region56: #{tpu_custom_call.1} parent=51 // pred_fallthru
          _
        %s372 = sand.u32 %s31, 1
        %s373 = scalar_lea.sflag [#allocation6], %s372
        %s374 = sand.u32 %s65, 1
        %s375 = smul.addr %s374, 8
        %s376 = scalar_lea.vmem [#allocation5], %s375
        // Predicated region
        $region57: #{tpu_custom_call.1} parent=51 // pred_check
          %p377 = pneg %p78
        $region58: #{tpu_custom_call.1} parent=51 // pred_check_branch
          %379 = sbr.rel (%p377) target = $region60
        $region59: #{tpu_custom_call.1} parent=51 // pred_region
          %380 = dma.done %s373, 128
        $region60: #{tpu_custom_call.1} parent=51 // pred_fallthru
          _
        // Predicated region
        $region61: #{tpu_custom_call.1} parent=51 // pred_check
          %p381 = pneg %p99
        $region62: #{tpu_custom_call.1} parent=51 // pred_check_branch
          %383 = sbr.rel (%p381) target = $region64
        $region63: #{tpu_custom_call.1} parent=51 // pred_region
          %384 = dma.done [#allocation6], 64
        $region64: #{tpu_custom_call.1} parent=51 // pred_fallthru
          _
        // Predicated region
        $region65: #{tpu_custom_call.1} parent=51 // pred_check
          %p385 = pneg %p120
        $region66: #{tpu_custom_call.1} parent=51 // pred_check_branch
          %387 = sbr.rel (%p385) target = $region68
        $region67: #{tpu_custom_call.1} parent=51 // pred_region
          %388 = dma.done [#allocation9], 16
        $region68: #{tpu_custom_call.1} parent=51 // pred_fallthru
          _
        // Predicated region
        $region69: #{tpu_custom_call.1} parent=51 // pred_check
          %p389 = pneg %p141
        $region70: #{tpu_custom_call.1} parent=51 // pred_check_branch
          %391 = sbr.rel (%p389) target = $region72
        $region71: #{tpu_custom_call.1} parent=51 // pred_region
          %392 = dma.done [#allocation9], 256
        $region72: #{tpu_custom_call.1} parent=51 // pred_fallthru
          _
        // Predicated region
        $region73: #{tpu_custom_call.1} parent=51 // pred_check
          %p393 = pneg %p162
        $region74: #{tpu_custom_call.1} parent=51 // pred_check_branch
          %395 = sbr.rel (%p393) target = $region76
        $region75: #{tpu_custom_call.1} parent=51 // pred_region
          %396 = dma.done [#allocation12], 16
        $region76: #{tpu_custom_call.1} parent=51 // pred_fallthru
          _
        // Predicated region
        $region77: #{tpu_custom_call.1} parent=51 // pred_check
          %p397 = pneg %p183
        $region78: #{tpu_custom_call.1} parent=51 // pred_check_branch
          %399 = sbr.rel (%p397) target = $region80
        $region79: #{tpu_custom_call.1} parent=51 // pred_region
          %400 = dma.done [#allocation12], 16
        $region80: #{tpu_custom_call.1} parent=51 // pred_fallthru
          _
        // Predicated region
        $region81: #{tpu_custom_call.1} parent=51 // pred_check
          %p401 = pneg %p204
        $region82: #{tpu_custom_call.1} parent=51 // pred_check_branch
          %403 = sbr.rel (%p401) target = $region84
        $region83: #{tpu_custom_call.1} parent=51 // pred_region
          %404 = dma.done [#allocation15], 16
        $region84: #{tpu_custom_call.1} parent=51 // pred_fallthru
          _
        %s405 = sand.u32 %s39, 1
        %s406 = scalar_lea.sflag [#allocation3], %s405
        %s407 = sand.u32 %s39, 1
        %s408 = smul.addr %s407, 128
        %s409 = scalar_lea.vmem [#allocation2], %s408
        %p410 = pneg %p52
        %p411 = pneg %p49
        %s412 = sand.u32 %s31, 1
        %s413 = scalar_lea.sflag [#allocation6], %s412
        %s414 = sand.u32 %s65, 1
        %s415 = smul.addr %s414, 8
        %s416 = scalar_lea.vmem [#allocation5], %s415
        %p417 = pneg %p78
        %p418 = pneg %p75
        %p419 = pneg %p99
        %p420 = pneg %p96
        %p421 = pneg %p120
        %p422 = pneg %p117
        %p423 = pneg %p141
        %p424 = pneg %p138
        %p425 = pneg %p162
        %p426 = pneg %p159
        %p427 = pneg %p183
        %p428 = pneg %p180
        %p429 = pneg %p204
        %p430 = pneg %p201
        %p431 = pneg %p230
        %p432 = pneg %p227
        %s433 = sand.u32 %s217, 1
        %s434 = scalar_lea.sflag [#allocation4], %s433
        %s435 = sand.u32 %s217, 1
        %s436 = smul.addr %s435, 8
        %s437 = scalar_lea.vmem [#allocation16], %s436
        %s438 = smul.u32 32, %s31
        %v440 = vld [vmem:[%s367] sm:$0xf]
        %v441 = vld [vmem:[%s367 + $0x4] sm:$0xf]
        %v442 = vld [vmem:[%s367 + $0x8] sm:$0xf]
        %v443 = vld [vmem:[%s367 + $0xc] sm:$0xf]
        %v444 = vld [vmem:[%s367 + $0x10] sm:$0xf]
        %v445 = vld [vmem:[%s367 + $0x14] sm:$0xf]
        %v446 = vld [vmem:[%s367 + $0x18] sm:$0xf]
        %v447 = vld [vmem:[%s367 + $0x1c] sm:$0xf]
        %v448 = vld [vmem:[%s367 + $0x20] sm:$0xf]
        %v449 = vld [vmem:[%s367 + $0x24] sm:$0xf]
        %v450 = vld [vmem:[%s367 + $0x28] sm:$0xf]
        %v451 = vld [vmem:[%s367 + $0x2c] sm:$0xf]
        %v452 = vld [vmem:[%s367 + $0x30] sm:$0xf]
        %v453 = vld [vmem:[%s367 + $0x34] sm:$0xf]
        %v454 = vld [vmem:[%s367 + $0x38] sm:$0xf]
        %v455 = vld [vmem:[%s367 + $0x3c] sm:$0xf]
        %v456 = vld [vmem:[%s367 + $0x40] sm:$0xf]
        %v457 = vld [vmem:[%s367 + $0x44] sm:$0xf]
        %v458 = vld [vmem:[%s367 + $0x48] sm:$0xf]
        %v459 = vld [vmem:[%s367 + $0x4c] sm:$0xf]
        %v460 = vld [vmem:[%s367 + $0x50] sm:$0xf]
        %v461 = vld [vmem:[%s367 + $0x54] sm:$0xf]
        %v462 = vld [vmem:[%s367 + $0x58] sm:$0xf]
        %v463 = vld [vmem:[%s367 + $0x5c] sm:$0xf]
        %v464 = vld [vmem:[%s367 + $0x60] sm:$0xf]
        %v465 = vld [vmem:[%s367 + $0x64] sm:$0xf]
        %v466 = vld [vmem:[%s367 + $0x68] sm:$0xf]
        %v467 = vld [vmem:[%s367 + $0x6c] sm:$0xf]
        %v468 = vld [vmem:[%s367 + $0x70] sm:$0xf]
        %v469 = vld [vmem:[%s367 + $0x74] sm:$0xf]
        %v470 = vld [vmem:[%s367 + $0x78] sm:$0xf]
        %v471 = vld [vmem:[%s367 + $0x7c] sm:$0xf]
        %v472 = vld [vmem:[#allocation7] sm:$0xf]
        %v473 = vld [vmem:[#allocation8] sm:$0x1]
        %v475 = vlaneseq
        %v476 = vshrl.u32 %v475, 7
        %v477 = vsub.s32 0, %v476
        %v478 = vrot.slane %v473, %v477
        %v512 = vunpack.c.l.b16 %v440
        %v513 = vunpack.c.l.b16 %v441
        %v514 = vunpack.c.l.b16 %v442
        %v515 = vunpack.c.l.b16 %v443
        %v516 = vunpack.c.l.b16 %v444
        %v517 = vunpack.c.l.b16 %v445
        %v518 = vunpack.c.l.b16 %v446
        %v519 = vunpack.c.l.b16 %v447
        %v520 = vunpack.c.l.b16 %v448
        %v521 = vunpack.c.l.b16 %v449
        %v522 = vunpack.c.l.b16 %v450
        %v523 = vunpack.c.l.b16 %v451
        %v524 = vunpack.c.l.b16 %v452
        %v525 = vunpack.c.l.b16 %v453
        %v526 = vunpack.c.l.b16 %v454
        %v527 = vunpack.c.l.b16 %v455
        %v528 = vunpack.c.l.b16 %v456
        %v529 = vunpack.c.l.b16 %v457
        %v530 = vunpack.c.l.b16 %v458
        %v531 = vunpack.c.l.b16 %v459
        %v532 = vunpack.c.l.b16 %v460
        %v533 = vunpack.c.l.b16 %v461
        %v534 = vunpack.c.l.b16 %v462
        %v535 = vunpack.c.l.b16 %v463
        %v536 = vunpack.c.l.b16 %v464
        %v537 = vunpack.c.l.b16 %v465
        %v538 = vunpack.c.l.b16 %v466
        %v539 = vunpack.c.l.b16 %v467
        %v540 = vunpack.c.l.b16 %v468
        %v541 = vunpack.c.l.b16 %v469
        %v542 = vunpack.c.l.b16 %v470
        %v543 = vunpack.c.l.b16 %v471
        %v544 = vpack.c.b16 %v513, %v512
        %v545 = vpack.c.b16 %v515, %v514
        %v546 = vpack.c.b16 %v517, %v516
        %v547 = vpack.c.b16 %v519, %v518
        %v548 = vpack.c.b16 %v521, %v520
        %v549 = vpack.c.b16 %v523, %v522
        %v550 = vpack.c.b16 %v525, %v524
        %v551 = vpack.c.b16 %v527, %v526
        %v552 = vpack.c.b16 %v529, %v528
        %v553 = vpack.c.b16 %v531, %v530
        %v554 = vpack.c.b16 %v533, %v532
        %v555 = vpack.c.b16 %v535, %v534
        %v556 = vpack.c.b16 %v537, %v536
        %v557 = vpack.c.b16 %v539, %v538
        %v558 = vpack.c.b16 %v541, %v540
        %v559 = vpack.c.b16 %v543, %v542
        %vm560 = vcmask 64512
        %v562 = vsel %vm560, %v544, 0
        %v565 = vsel %vm560, %v545, 0
        %v568 = vsel %vm560, %v546, 0
        %v571 = vsel %vm560, %v547, 0
        %v574 = vsel %vm560, %v548, 0
        %v577 = vsel %vm560, %v549, 0
        %v580 = vsel %vm560, %v550, 0
        %v583 = vsel %vm560, %v551, 0
        %v586 = vsel %vm560, %v552, 0
        %v589 = vsel %vm560, %v553, 0
        %v592 = vsel %vm560, %v554, 0
        %v595 = vsel %vm560, %v555, 0
        %v598 = vsel %vm560, %v556, 0
        %v601 = vsel %vm560, %v557, 0
        %v604 = vsel %vm560, %v558, 0
        %v607 = vsel %vm560, %v559, 0
        %vm609 = vcmask 1043456
        %v611 = vsel %vm609, %v472, 0
        %613 = vmatprep.subr.bf16.mxu0 0
        %614 = vmatpush1.bf16.msra.mxu0 %v611
        %615 = vmatprep.subr.bf16.mxu0 0
        %616 = vmatpush1.bf16.msra.mxu0 0
        %617 = vmatprep.subr.bf16.mxu0 0
        %618 = vmatpush1.bf16.msra.mxu0 0
        %619 = vmatprep.subr.bf16.mxu0 0
        %620 = vmatpush1.bf16.msra.mxu0 0
        %621 = vmatprep.subr.bf16.mxu0 0
        %622 = vmatpush1.bf16.msra.mxu0 0
        %623 = vmatprep.subr.bf16.mxu0 0
        %624 = vmatpush1.bf16.msra.mxu0 0
        %625 = vmatprep.subr.bf16.mxu0 0
        %626 = vmatpush1.bf16.msra.mxu0 0
        %627 = vmatprep.subr.bf16.mxu0 0
        %628 = vmatpush1.bf16.msra.mxu0 0
        %629 = vmatprep.subr.bf16.mxu0 0
        %630 = vmatpush1.bf16.msra.mxu0 0
        %631 = vmatprep.subr.bf16.mxu0 0
        %632 = vmatpush1.bf16.msra.mxu0 0
        %633 = vmatprep.subr.bf16.mxu0 0
        %634 = vmatpush1.bf16.msra.mxu0 0
        %635 = vmatprep.subr.bf16.mxu0 0
        %636 = vmatpush1.bf16.msra.mxu0 0
        %637 = vmatprep.subr.bf16.mxu0 0
        %638 = vmatpush1.bf16.msra.mxu0 0
        %639 = vmatprep.subr.bf16.mxu0 0
        %640 = vmatpush1.bf16.msra.mxu0 0
        %641 = vmatprep.subr.bf16.mxu0 0
        %642 = vmatpush1.bf16.msra.mxu0 0
        %643 = vmatprep.subr.bf16.mxu0 0
        %644 = vmatpush1.bf16.msra.mxu0 0
        %645 = vmatprep.mubr.bf16.mxu0 0
        %646 = vmatmul.mubr.bf16.gmra.mrb[0].mxu0 %v562
        %v647 = vpop.f32.mrb[0].mxu0
        %v648 = vadd.f32 %v478, %v647
        %v649 = vpop.f32.mrb[0].mxu0
        %v650 = vpop.f32.mrb[0].mxu0
        %v651 = vadd.f32 %v478, %v650
        %v652 = vpop.f32.mrb[0].mxu0
        %653 = vmatprep.mubr.bf16.mxu0 0
        %654 = vmatmul.mubr.bf16.gmra.mrb[0].mxu0 %v565
        %v655 = vpop.f32.mrb[0].mxu0
        %v656 = vadd.f32 %v478, %v655
        %v657 = vpop.f32.mrb[0].mxu0
        %v658 = vpop.f32.mrb[0].mxu0
        %v659 = vadd.f32 %v478, %v658
        %v660 = vpop.f32.mrb[0].mxu0
        %661 = vmatprep.mubr.bf16.mxu0 0
        %662 = vmatmul.mubr.bf16.gmra.mrb[0].mxu0 %v568
        %v663 = vpop.f32.mrb[0].mxu0
        %v664 = vadd.f32 %v478, %v663
        %v665 = vpop.f32.mrb[0].mxu0
        %v666 = vpop.f32.mrb[0].mxu0
        %v667 = vadd.f32 %v478, %v666
        %v668 = vpop.f32.mrb[0].mxu0
        %669 = vmatprep.mubr.bf16.mxu0 0
        %670 = vmatmul.mubr.bf16.gmra.mrb[0].mxu0 %v571
        %v671 = vpop.f32.mrb[0].mxu0
        %v672 = vadd.f32 %v478, %v671
        %v673 = vpop.f32.mrb[0].mxu0
        %v674 = vpop.f32.mrb[0].mxu0
        %v675 = vadd.f32 %v478, %v674
        %v676 = vpop.f32.mrb[0].mxu0
        %677 = vmatprep.mubr.bf16.mxu0 0
        %678 = vmatmul.mubr.bf16.gmra.mrb[0].mxu0 %v574
        %v679 = vpop.f32.mrb[0].mxu0
        %v680 = vadd.f32 %v478, %v679
        %v681 = vpop.f32.mrb[0].mxu0
        %v682 = vpop.f32.mrb[0].mxu0
        %v683 = vadd.f32 %v478, %v682
        %v684 = vpop.f32.mrb[0].mxu0
        %685 = vmatprep.mubr.bf16.mxu0 0
        %686 = vmatmul.mubr.bf16.gmra.mrb[0].mxu0 %v577
        %v687 = vpop.f32.mrb[0].mxu0
        %v688 = vadd.f32 %v478, %v687
        %v689 = vpop.f32.mrb[0].mxu0
        %v690 = vpop.f32.mrb[0].mxu0
        %v691 = vadd.f32 %v478, %v690
        %v692 = vpop.f32.mrb[0].mxu0
        %693 = vmatprep.mubr.bf16.mxu0 0
        %694 = vmatmul.mubr.bf16.gmra.mrb[0].mxu0 %v580
        %v695 = vpop.f32.mrb[0].mxu0
        %v696 = vadd.f32 %v478, %v695
        %v697 = vpop.f32.mrb[0].mxu0
        %v698 = vpop.f32.mrb[0].mxu0
        %v699 = vadd.f32 %v478, %v698
        %v700 = vpop.f32.mrb[0].mxu0
        %701 = vmatprep.mubr.bf16.mxu0 0
        %702 = vmatmul.mubr.bf16.gmra.mrb[0].mxu0 %v583
        %v703 = vpop.f32.mrb[0].mxu0
        %v704 = vadd.f32 %v478, %v703
        %v705 = vpop.f32.mrb[0].mxu0
        %v706 = vpop.f32.mrb[0].mxu0
        %v707 = vadd.f32 %v478, %v706
        %v708 = vpop.f32.mrb[0].mxu0
        %709 = vmatprep.mubr.bf16.mxu0 0
        %710 = vmatmul.mubr.bf16.gmra.mrb[0].mxu0 %v586
        %v711 = vpop.f32.mrb[0].mxu0
        %v712 = vadd.f32 %v478, %v711
        %v713 = vpop.f32.mrb[0].mxu0
        %v714 = vpop.f32.mrb[0].mxu0
        %v715 = vadd.f32 %v478, %v714
        %v716 = vpop.f32.mrb[0].mxu0
        %717 = vmatprep.mubr.bf16.mxu0 0
        %718 = vmatmul.mubr.bf16.gmra.mrb[0].mxu0 %v589
        %v719 = vpop.f32.mrb[0].mxu0
        %v720 = vadd.f32 %v478, %v719
        %v721 = vpop.f32.mrb[0].mxu0
        %v722 = vpop.f32.mrb[0].mxu0
        %v723 = vadd.f32 %v478, %v722
        %v724 = vpop.f32.mrb[0].mxu0
        %725 = vmatprep.mubr.bf16.mxu0 0
        %726 = vmatmul.mubr.bf16.gmra.mrb[0].mxu0 %v592
        %v727 = vpop.f32.mrb[0].mxu0
        %v728 = vadd.f32 %v478, %v727
        %v729 = vpop.f32.mrb[0].mxu0
        %v730 = vpop.f32.mrb[0].mxu0
        %v731 = vadd.f32 %v478, %v730
        %v732 = vpop.f32.mrb[0].mxu0
        %733 = vmatprep.mubr.bf16.mxu0 0
        %734 = vmatmul.mubr.bf16.gmra.mrb[0].mxu0 %v595
        %v735 = vpop.f32.mrb[0].mxu0
        %v736 = vadd.f32 %v478, %v735
        %v737 = vpop.f32.mrb[0].mxu0
        %v738 = vpop.f32.mrb[0].mxu0
        %v739 = vadd.f32 %v478, %v738
        %v740 = vpop.f32.mrb[0].mxu0
        %741 = vmatprep.mubr.bf16.mxu0 0
        %742 = vmatmul.mubr.bf16.gmra.mrb[0].mxu0 %v598
        %v743 = vpop.f32.mrb[0].mxu0
        %v744 = vadd.f32 %v478, %v743
        %v745 = vpop.f32.mrb[0].mxu0
        %v746 = vpop.f32.mrb[0].mxu0
        %v747 = vadd.f32 %v478, %v746
        %v748 = vpop.f32.mrb[0].mxu0
        %749 = vmatprep.mubr.bf16.mxu0 0
        %750 = vmatmul.mubr.bf16.gmra.mrb[0].mxu0 %v601
        %v751 = vpop.f32.mrb[0].mxu0
        %v752 = vadd.f32 %v478, %v751
        %v753 = vpop.f32.mrb[0].mxu0
        %v754 = vpop.f32.mrb[0].mxu0
        %v755 = vadd.f32 %v478, %v754
        %v756 = vpop.f32.mrb[0].mxu0
        %757 = vmatprep.mubr.bf16.mxu0 0
        %758 = vmatmul.mubr.bf16.gmra.mrb[0].mxu0 %v604
        %v759 = vpop.f32.mrb[0].mxu0
        %v760 = vadd.f32 %v478, %v759
        %v761 = vpop.f32.mrb[0].mxu0
        %v762 = vpop.f32.mrb[0].mxu0
        %v763 = vadd.f32 %v478, %v762
        %v764 = vpop.f32.mrb[0].mxu0
        %765 = vmatprep.mubr.bf16.mxu0 0
        %766 = vmatmul.mubr.bf16.gmra.mrb[0].mxu0 %v607
        %v767 = vpop.f32.mrb[0].mxu0
        %v768 = vadd.f32 %v478, %v767
        %v769 = vpop.f32.mrb[0].mxu0
        %v770 = vpop.f32.mrb[0].mxu0
        %v771 = vadd.f32 %v478, %v770
        %v772 = vpop.f32.mrb[0].mxu0
        %773 = vdwg.mxu0
        %v774 = vmax.f32 %v648, 0.0
        %v775 = vmax.f32 %v651, 0.0
        %v776 = vmax.f32 %v656, 0.0
        %v777 = vmax.f32 %v659, 0.0
        %v778 = vmax.f32 %v664, 0.0
        %v779 = vmax.f32 %v667, 0.0
        %v780 = vmax.f32 %v672, 0.0
        %v781 = vmax.f32 %v675, 0.0
        %v782 = vmax.f32 %v680, 0.0
        %v783 = vmax.f32 %v683, 0.0
        %v784 = vmax.f32 %v688, 0.0
        %v785 = vmax.f32 %v691, 0.0
        %v786 = vmax.f32 %v696, 0.0
        %v787 = vmax.f32 %v699, 0.0
        %v788 = vmax.f32 %v704, 0.0
        %v789 = vmax.f32 %v707, 0.0
        %v790 = vmax.f32 %v712, 0.0
        %v791 = vmax.f32 %v715, 0.0
        %v792 = vmax.f32 %v720, 0.0
        %v793 = vmax.f32 %v723, 0.0
        %v794 = vmax.f32 %v728, 0.0
        %v795 = vmax.f32 %v731, 0.0
        %v796 = vmax.f32 %v736, 0.0
        %v797 = vmax.f32 %v739, 0.0
        %v798 = vmax.f32 %v744, 0.0
        %v799 = vmax.f32 %v747, 0.0
        %v800 = vmax.f32 %v752, 0.0
        %v801 = vmax.f32 %v755, 0.0
        %v802 = vmax.f32 %v760, 0.0
        %v803 = vmax.f32 %v763, 0.0
        %v804 = vmax.f32 %v768, 0.0
        %v805 = vmax.f32 %v771, 0.0
        %v806 = vpack.c.bf16 %v775, %v774
        %v807 = vpack.c.bf16 %v777, %v776
        %v808 = vpack.c.bf16 %v779, %v778
        %v809 = vpack.c.bf16 %v781, %v780
        %v810 = vpack.c.bf16 %v783, %v782
        %v811 = vpack.c.bf16 %v785, %v784
        %v812 = vpack.c.bf16 %v787, %v786
        %v813 = vpack.c.bf16 %v789, %v788
        %v814 = vpack.c.bf16 %v791, %v790
        %v815 = vpack.c.bf16 %v793, %v792
        %v816 = vpack.c.bf16 %v795, %v794
        %v817 = vpack.c.bf16 %v797, %v796
        %v818 = vpack.c.bf16 %v799, %v798
        %v819 = vpack.c.bf16 %v801, %v800
        %v820 = vpack.c.bf16 %v803, %v802
        %v821 = vpack.c.bf16 %v805, %v804
        %v822 = vld [vmem:[#allocation10] sm:$0xf]
        %v823 = vld [vmem:[#allocation10 + $0x4] sm:$0xf]
        %v824 = vld [vmem:[#allocation10 + $0x8] sm:$0xf]
        %v825 = vld [vmem:[#allocation10 + $0xc] sm:$0xf]
        %v826 = vld [vmem:[#allocation11] sm:$0x1]
        %v828 = vlaneseq
        %v829 = vshrl.u32 %v828, 7
        %v830 = vsub.s32 0, %v829
        %v831 = vrot.slane %v826, %v830
        %v837 = vunpack.c.l.b16 %v822
        %v838 = vunpack.c.l.b16 %v823
        %v839 = vunpack.c.l.b16 %v824
        %v840 = vunpack.c.l.b16 %v825
        %v841 = vpack.c.b16 %v838, %v837
        %v842 = vpack.c.b16 %v840, %v839
        %vm845 = vcmask 261120
        %v847 = vsel %vm845, %v806, 0
        %v850 = vsel %vm845, %v807, 0
        %v853 = vsel %vm845, %v808, 0
        %v856 = vsel %vm845, %v809, 0
        %v859 = vsel %vm845, %v810, 0
        %v862 = vsel %vm845, %v811, 0
        %v865 = vsel %vm845, %v812, 0
        %v868 = vsel %vm845, %v813, 0
        %v871 = vsel %vm845, %v814, 0
        %v874 = vsel %vm845, %v815, 0
        %v877 = vsel %vm845, %v816, 0
        %v880 = vsel %vm845, %v817, 0
        %v883 = vsel %vm845, %v818, 0
        %v886 = vsel %vm845, %v819, 0
        %v889 = vsel %vm845, %v820, 0
        %v892 = vsel %vm845, %v821, 0
        %894 = vmatprep.subr.bf16.mxu0 0
        %895 = vmatpush1.bf16.msra.mxu0 %v841
        %896 = vmatprep.subr.bf16.mxu0 0
        %897 = vmatpush1.bf16.msra.mxu0 %v842
        %898 = vmatprep.subr.bf16.mxu0 0
        %899 = vmatpush1.bf16.msra.mxu0 0
        %900 = vmatprep.subr.bf16.mxu0 0
        %901 = vmatpush1.bf16.msra.mxu0 0
        %902 = vmatprep.subr.bf16.mxu0 0
        %903 = vmatpush1.bf16.msra.mxu0 0
        %904 = vmatprep.subr.bf16.mxu0 0
        %905 = vmatpush1.bf16.msra.mxu0 0
        %906 = vmatprep.subr.bf16.mxu0 0
        %907 = vmatpush1.bf16.msra.mxu0 0
        %908 = vmatprep.subr.bf16.mxu0 0
        %909 = vmatpush1.bf16.msra.mxu0 0
        %910 = vmatprep.subr.bf16.mxu0 0
        %911 = vmatpush1.bf16.msra.mxu0 0
        %912 = vmatprep.subr.bf16.mxu0 0
        %913 = vmatpush1.bf16.msra.mxu0 0
        %914 = vmatprep.subr.bf16.mxu0 0
        %915 = vmatpush1.bf16.msra.mxu0 0
        %916 = vmatprep.subr.bf16.mxu0 0
        %917 = vmatpush1.bf16.msra.mxu0 0
        %918 = vmatprep.subr.bf16.mxu0 0
        %919 = vmatpush1.bf16.msra.mxu0 0
        %920 = vmatprep.subr.bf16.mxu0 0
        %921 = vmatpush1.bf16.msra.mxu0 0
        %922 = vmatprep.subr.bf16.mxu0 0
        %923 = vmatpush1.bf16.msra.mxu0 0
        %924 = vmatprep.subr.bf16.mxu0 0
        %925 = vmatpush1.bf16.msra.mxu0 0
        %926 = vmatprep.mubr.bf16.mxu0 0
        %927 = vmatmul.mubr.bf16.gmra.mrb[0].mxu0 %v847
        %v928 = vpop.f32.mrb[0].mxu0
        %v929 = vadd.f32 %v831, %v928
        %v930 = vpop.f32.mrb[0].mxu0
        %v931 = vpop.f32.mrb[0].mxu0
        %v932 = vadd.f32 %v831, %v931
        %v933 = vpop.f32.mrb[0].mxu0
        %934 = vmatprep.mubr.bf16.mxu0 0
        %935 = vmatmul.mubr.bf16.gmra.mrb[0].mxu0 %v850
        %v936 = vpop.f32.mrb[0].mxu0
        %v937 = vadd.f32 %v831, %v936
        %v938 = vpop.f32.mrb[0].mxu0
        %v939 = vpop.f32.mrb[0].mxu0
        %v940 = vadd.f32 %v831, %v939
        %v941 = vpop.f32.mrb[0].mxu0
        %942 = vmatprep.mubr.bf16.mxu0 0
        %943 = vmatmul.mubr.bf16.gmra.mrb[0].mxu0 %v853
        %v944 = vpop.f32.mrb[0].mxu0
        %v945 = vadd.f32 %v831, %v944
        %v946 = vpop.f32.mrb[0].mxu0
        %v947 = vpop.f32.mrb[0].mxu0
        %v948 = vadd.f32 %v831, %v947
        %v949 = vpop.f32.mrb[0].mxu0
        %950 = vmatprep.mubr.bf16.mxu0 0
        %951 = vmatmul.mubr.bf16.gmra.mrb[0].mxu0 %v856
        %v952 = vpop.f32.mrb[0].mxu0
        %v953 = vadd.f32 %v831, %v952
        %v954 = vpop.f32.mrb[0].mxu0
        %v955 = vpop.f32.mrb[0].mxu0
        %v956 = vadd.f32 %v831, %v955
        %v957 = vpop.f32.mrb[0].mxu0
        %958 = vmatprep.mubr.bf16.mxu0 0
        %959 = vmatmul.mubr.bf16.gmra.mrb[0].mxu0 %v859
        %v960 = vpop.f32.mrb[0].mxu0
        %v961 = vadd.f32 %v831, %v960
        %v962 = vpop.f32.mrb[0].mxu0
        %v963 = vpop.f32.mrb[0].mxu0
        %v964 = vadd.f32 %v831, %v963
        %v965 = vpop.f32.mrb[0].mxu0
        %966 = vmatprep.mubr.bf16.mxu0 0
        %967 = vmatmul.mubr.bf16.gmra.mrb[0].mxu0 %v862
        %v968 = vpop.f32.mrb[0].mxu0
        %v969 = vadd.f32 %v831, %v968
        %v970 = vpop.f32.mrb[0].mxu0
        %v971 = vpop.f32.mrb[0].mxu0
        %v972 = vadd.f32 %v831, %v971
        %v973 = vpop.f32.mrb[0].mxu0
        %974 = vmatprep.mubr.bf16.mxu0 0
        %975 = vmatmul.mubr.bf16.gmra.mrb[0].mxu0 %v865
        %v976 = vpop.f32.mrb[0].mxu0
        %v977 = vadd.f32 %v831, %v976
        %v978 = vpop.f32.mrb[0].mxu0
        %v979 = vpop.f32.mrb[0].mxu0
        %v980 = vadd.f32 %v831, %v979
        %v981 = vpop.f32.mrb[0].mxu0
        %982 = vmatprep.mubr.bf16.mxu0 0
        %983 = vmatmul.mubr.bf16.gmra.mrb[0].mxu0 %v868
        %v984 = vpop.f32.mrb[0].mxu0
        %v985 = vadd.f32 %v831, %v984
        %v986 = vpop.f32.mrb[0].mxu0
        %v987 = vpop.f32.mrb[0].mxu0
        %v988 = vadd.f32 %v831, %v987
        %v989 = vpop.f32.mrb[0].mxu0
        %990 = vmatprep.mubr.bf16.mxu0 0
        %991 = vmatmul.mubr.bf16.gmra.mrb[0].mxu0 %v871
        %v992 = vpop.f32.mrb[0].mxu0
        %v993 = vadd.f32 %v831, %v992
        %v994 = vpop.f32.mrb[0].mxu0
        %v995 = vpop.f32.mrb[0].mxu0
        %v996 = vadd.f32 %v831, %v995
        %v997 = vpop.f32.mrb[0].mxu0
        %998 = vmatprep.mubr.bf16.mxu0 0
        %999 = vmatmul.mubr.bf16.gmra.mrb[0].mxu0 %v874
        %v1000 = vpop.f32.mrb[0].mxu0
        %v1001 = vadd.f32 %v831, %v1000
        %v1002 = vpop.f32.mrb[0].mxu0
        %v1003 = vpop.f32.mrb[0].mxu0
        %v1004 = vadd.f32 %v831, %v1003
        %v1005 = vpop.f32.mrb[0].mxu0
        %1006 = vmatprep.mubr.bf16.mxu0 0
        %1007 = vmatmul.mubr.bf16.gmra.mrb[0].mxu0 %v877
        %v1008 = vpop.f32.mrb[0].mxu0
        %v1009 = vadd.f32 %v831, %v1008
        %v1010 = vpop.f32.mrb[0].mxu0
        %v1011 = vpop.f32.mrb[0].mxu0
        %v1012 = vadd.f32 %v831, %v1011
        %v1013 = vpop.f32.mrb[0].mxu0
        %1014 = vmatprep.mubr.bf16.mxu0 0
        %1015 = vmatmul.mubr.bf16.gmra.mrb[0].mxu0 %v880
        %v1016 = vpop.f32.mrb[0].mxu0
        %v1017 = vadd.f32 %v831, %v1016
        %v1018 = vpop.f32.mrb[0].mxu0
        %v1019 = vpop.f32.mrb[0].mxu0
        %v1020 = vadd.f32 %v831, %v1019
        %v1021 = vpop.f32.mrb[0].mxu0
        %1022 = vmatprep.mubr.bf16.mxu0 0
        %1023 = vmatmul.mubr.bf16.gmra.mrb[0].mxu0 %v883
        %v1024 = vpop.f32.mrb[0].mxu0
        %v1025 = vadd.f32 %v831, %v1024
        %v1026 = vpop.f32.mrb[0].mxu0
        %v1027 = vpop.f32.mrb[0].mxu0
        %v1028 = vadd.f32 %v831, %v1027
        %v1029 = vpop.f32.mrb[0].mxu0
        %1030 = vmatprep.mubr.bf16.mxu0 0
        %1031 = vmatmul.mubr.bf16.gmra.mrb[0].mxu0 %v886
        %v1032 = vpop.f32.mrb[0].mxu0
        %v1033 = vadd.f32 %v831, %v1032
        %v1034 = vpop.f32.mrb[0].mxu0
        %v1035 = vpop.f32.mrb[0].mxu0
        %v1036 = vadd.f32 %v831, %v1035
        %v1037 = vpop.f32.mrb[0].mxu0
        %1038 = vmatprep.mubr.bf16.mxu0 0
        %1039 = vmatmul.mubr.bf16.gmra.mrb[0].mxu0 %v889
        %v1040 = vpop.f32.mrb[0].mxu0
        %v1041 = vadd.f32 %v831, %v1040
        %v1042 = vpop.f32.mrb[0].mxu0
        %v1043 = vpop.f32.mrb[0].mxu0
        %v1044 = vadd.f32 %v831, %v1043
        %v1045 = vpop.f32.mrb[0].mxu0
        %1046 = vmatprep.mubr.bf16.mxu0 0
        %1047 = vmatmul.mubr.bf16.gmra.mrb[0].mxu0 %v892
        %v1048 = vpop.f32.mrb[0].mxu0
        %v1049 = vadd.f32 %v831, %v1048
        %v1050 = vpop.f32.mrb[0].mxu0
        %v1051 = vpop.f32.mrb[0].mxu0
        %v1052 = vadd.f32 %v831, %v1051
        %v1053 = vpop.f32.mrb[0].mxu0
        %1054 = vdwg.mxu0
        %v1055 = vmax.f32 %v929, 0.0
        %v1056 = vmax.f32 %v932, 0.0
        %v1057 = vmax.f32 %v937, 0.0
        %v1058 = vmax.f32 %v940, 0.0
        %v1059 = vmax.f32 %v945, 0.0
        %v1060 = vmax.f32 %v948, 0.0
        %v1061 = vmax.f32 %v953, 0.0
        %v1062 = vmax.f32 %v956, 0.0
        %v1063 = vmax.f32 %v961, 0.0
        %v1064 = vmax.f32 %v964, 0.0
        %v1065 = vmax.f32 %v969, 0.0
        %v1066 = vmax.f32 %v972, 0.0
        %v1067 = vmax.f32 %v977, 0.0
        %v1068 = vmax.f32 %v980, 0.0
        %v1069 = vmax.f32 %v985, 0.0
        %v1070 = vmax.f32 %v988, 0.0
        %v1071 = vmax.f32 %v993, 0.0
        %v1072 = vmax.f32 %v996, 0.0
        %v1073 = vmax.f32 %v1001, 0.0
        %v1074 = vmax.f32 %v1004, 0.0
        %v1075 = vmax.f32 %v1009, 0.0
        %v1076 = vmax.f32 %v1012, 0.0
        %v1077 = vmax.f32 %v1017, 0.0
        %v1078 = vmax.f32 %v1020, 0.0
        %v1079 = vmax.f32 %v1025, 0.0
        %v1080 = vmax.f32 %v1028, 0.0
        %v1081 = vmax.f32 %v1033, 0.0
        %v1082 = vmax.f32 %v1036, 0.0
        %v1083 = vmax.f32 %v1041, 0.0
        %v1084 = vmax.f32 %v1044, 0.0
        %v1085 = vmax.f32 %v1049, 0.0
        %v1086 = vmax.f32 %v1052, 0.0
        %v1087 = vld [vmem:[#allocation13] sm:$0x1]
        %v1089 = vlaneseq
        %v1090 = vshrl.u32 %v1089, 7
        %v1091 = vsub.s32 0, %v1090
        %v1092 = vrot.slane %v1087, %v1091
        %v1094 = vmul.f32 %v1055, %v1092
        %v1095 = vmul.f32 %v1056, %v1092
        %v1096 = vmul.f32 %v1057, %v1092
        %v1097 = vmul.f32 %v1058, %v1092
        %v1098 = vmul.f32 %v1059, %v1092
        %v1099 = vmul.f32 %v1060, %v1092
        %v1100 = vmul.f32 %v1061, %v1092
        %v1101 = vmul.f32 %v1062, %v1092
        %v1102 = vmul.f32 %v1063, %v1092
        %v1103 = vmul.f32 %v1064, %v1092
        %v1104 = vmul.f32 %v1065, %v1092
        %v1105 = vmul.f32 %v1066, %v1092
        %v1106 = vmul.f32 %v1067, %v1092
        %v1107 = vmul.f32 %v1068, %v1092
        %v1108 = vmul.f32 %v1069, %v1092
        %v1109 = vmul.f32 %v1070, %v1092
        %v1110 = vmul.f32 %v1071, %v1092
        %v1111 = vmul.f32 %v1072, %v1092
        %v1112 = vmul.f32 %v1073, %v1092
        %v1113 = vmul.f32 %v1074, %v1092
        %v1114 = vmul.f32 %v1075, %v1092
        %v1115 = vmul.f32 %v1076, %v1092
        %v1116 = vmul.f32 %v1077, %v1092
        %v1117 = vmul.f32 %v1078, %v1092
        %v1118 = vmul.f32 %v1079, %v1092
        %v1119 = vmul.f32 %v1080, %v1092
        %v1120 = vmul.f32 %v1081, %v1092
        %v1121 = vmul.f32 %v1082, %v1092
        %v1122 = vmul.f32 %v1083, %v1092
        %v1123 = vmul.f32 %v1084, %v1092
        %v1124 = vmul.f32 %v1085, %v1092
        %v1125 = vmul.f32 %v1086, %v1092
        %v1126 = vld [vmem:[#allocation14] sm:$0x1]
        %v1128 = vlaneseq
        %v1129 = vshrl.u32 %v1128, 7
        %v1130 = vsub.s32 0, %v1129
        %v1131 = vrot.slane %v1126, %v1130
        %v1133 = vadd.f32 %v1094, %v1131
        %v1134 = vadd.f32 %v1095, %v1131
        %v1135 = vadd.f32 %v1096, %v1131
        %v1136 = vadd.f32 %v1097, %v1131
        %v1137 = vadd.f32 %v1098, %v1131
        %v1138 = vadd.f32 %v1099, %v1131
        %v1139 = vadd.f32 %v1100, %v1131
        %v1140 = vadd.f32 %v1101, %v1131
        %v1141 = vadd.f32 %v1102, %v1131
        %v1142 = vadd.f32 %v1103, %v1131
        %v1143 = vadd.f32 %v1104, %v1131
        %v1144 = vadd.f32 %v1105, %v1131
        %v1145 = vadd.f32 %v1106, %v1131
        %v1146 = vadd.f32 %v1107, %v1131
        %v1147 = vadd.f32 %v1108, %v1131
        %v1148 = vadd.f32 %v1109, %v1131
        %v1149 = vadd.f32 %v1110, %v1131
        %v1150 = vadd.f32 %v1111, %v1131
        %v1151 = vadd.f32 %v1112, %v1131
        %v1152 = vadd.f32 %v1113, %v1131
        %v1153 = vadd.f32 %v1114, %v1131
        %v1154 = vadd.f32 %v1115, %v1131
        %v1155 = vadd.f32 %v1116, %v1131
        %v1156 = vadd.f32 %v1117, %v1131
        %v1157 = vadd.f32 %v1118, %v1131
        %v1158 = vadd.f32 %v1119, %v1131
        %v1159 = vadd.f32 %v1120, %v1131
        %v1160 = vadd.f32 %v1121, %v1131
        %v1161 = vadd.f32 %v1122, %v1131
        %v1162 = vadd.f32 %v1123, %v1131
        %v1163 = vadd.f32 %v1124, %v1131
        %v1164 = vadd.f32 %v1125, %v1131
        %v1165 = vld [vmem:[%s376] sm:$0xff]
        %v1166 = vlaneseq
        %v1167 = vshrl.u32 %v1166, 7
        %v1168 = vsub.s32 0, %v1167
        %v1169 = vrot.slane %v1165, %v1168
        %1171 = vbcast.lane.b32.xlu0 %v1169, 256
        %v1172 = vpop.permute.xlu0 %1171
        %s1174 = sor.u32 256, 8
        %1175 = vbcast.lane.b32.xlu0 %v1169, %s1174
        %v1176 = vpop.permute.xlu0 %1175
        %s1178 = sor.u32 256, 16
        %1179 = vbcast.lane.b32.xlu0 %v1169, %s1178
        %v1180 = vpop.permute.xlu0 %1179
        %s1182 = sor.u32 256, 24
        %1183 = vbcast.lane.b32.xlu0 %v1169, %s1182
        %v1184 = vpop.permute.xlu0 %1183
        %v1185 = vlaneseq
        %v1186 = vshrl.u32 %v1185, 7
        %v1187 = vsub.s32 1, %v1186
        %v1188 = vrot.slane %v1165, %v1187
        %1190 = vbcast.lane.b32.xlu0 %v1188, 256
        %v1191 = vpop.permute.xlu0 %1190
        %s1193 = sor.u32 256, 8
        %1194 = vbcast.lane.b32.xlu0 %v1188, %s1193
        %v1195 = vpop.permute.xlu0 %1194
        %s1197 = sor.u32 256, 16
        %1198 = vbcast.lane.b32.xlu0 %v1188, %s1197
        %v1199 = vpop.permute.xlu0 %1198
        %s1201 = sor.u32 256, 24
        %1202 = vbcast.lane.b32.xlu0 %v1188, %s1201
        %v1203 = vpop.permute.xlu0 %1202
        %v1204 = vlaneseq
        %v1205 = vshrl.u32 %v1204, 7
        %v1206 = vsub.s32 2, %v1205
        %v1207 = vrot.slane %v1165, %v1206
        %1209 = vbcast.lane.b32.xlu0 %v1207, 256
        %v1210 = vpop.permute.xlu0 %1209
        %s1212 = sor.u32 256, 8
        %1213 = vbcast.lane.b32.xlu0 %v1207, %s1212
        %v1214 = vpop.permute.xlu0 %1213
        %s1216 = sor.u32 256, 16
        %1217 = vbcast.lane.b32.xlu0 %v1207, %s1216
        %v1218 = vpop.permute.xlu0 %1217
        %s1220 = sor.u32 256, 24
        %1221 = vbcast.lane.b32.xlu0 %v1207, %s1220
        %v1222 = vpop.permute.xlu0 %1221
        %v1223 = vlaneseq
        %v1224 = vshrl.u32 %v1223, 7
        %v1225 = vsub.s32 3, %v1224
        %v1226 = vrot.slane %v1165, %v1225
        %1228 = vbcast.lane.b32.xlu0 %v1226, 256
        %v1229 = vpop.permute.xlu0 %1228
        %s1231 = sor.u32 256, 8
        %1232 = vbcast.lane.b32.xlu0 %v1226, %s1231
        %v1233 = vpop.permute.xlu0 %1232
        %s1235 = sor.u32 256, 16
        %1236 = vbcast.lane.b32.xlu0 %v1226, %s1235
        %v1237 = vpop.permute.xlu0 %1236
        %s1239 = sor.u32 256, 24
        %1240 = vbcast.lane.b32.xlu0 %v1226, %s1239
        %v1241 = vpop.permute.xlu0 %1240
        %v1242 = vlaneseq
        %v1243 = vshrl.u32 %v1242, 7
        %v1244 = vsub.s32 4, %v1243
        %v1245 = vrot.slane %v1165, %v1244
        %1247 = vbcast.lane.b32.xlu0 %v1245, 256
        %v1248 = vpop.permute.xlu0 %1247
        %s1250 = sor.u32 256, 8
        %1251 = vbcast.lane.b32.xlu0 %v1245, %s1250
        %v1252 = vpop.permute.xlu0 %1251
        %s1254 = sor.u32 256, 16
        %1255 = vbcast.lane.b32.xlu0 %v1245, %s1254
        %v1256 = vpop.permute.xlu0 %1255
        %s1258 = sor.u32 256, 24
        %1259 = vbcast.lane.b32.xlu0 %v1245, %s1258
        %v1260 = vpop.permute.xlu0 %1259
        %v1261 = vlaneseq
        %v1262 = vshrl.u32 %v1261, 7
        %v1263 = vsub.s32 5, %v1262
        %v1264 = vrot.slane %v1165, %v1263
        %1266 = vbcast.lane.b32.xlu0 %v1264, 256
        %v1267 = vpop.permute.xlu0 %1266
        %s1269 = sor.u32 256, 8
        %1270 = vbcast.lane.b32.xlu0 %v1264, %s1269
        %v1271 = vpop.permute.xlu0 %1270
        %s1273 = sor.u32 256, 16
        %1274 = vbcast.lane.b32.xlu0 %v1264, %s1273
        %v1275 = vpop.permute.xlu0 %1274
        %s1277 = sor.u32 256, 24
        %1278 = vbcast.lane.b32.xlu0 %v1264, %s1277
        %v1279 = vpop.permute.xlu0 %1278
        %v1280 = vlaneseq
        %v1281 = vshrl.u32 %v1280, 7
        %v1282 = vsub.s32 6, %v1281
        %v1283 = vrot.slane %v1165, %v1282
        %1285 = vbcast.lane.b32.xlu0 %v1283, 256
        %v1286 = vpop.permute.xlu0 %1285
        %s1288 = sor.u32 256, 8
        %1289 = vbcast.lane.b32.xlu0 %v1283, %s1288
        %v1290 = vpop.permute.xlu0 %1289
        %s1292 = sor.u32 256, 16
        %1293 = vbcast.lane.b32.xlu0 %v1283, %s1292
        %v1294 = vpop.permute.xlu0 %1293
        %s1296 = sor.u32 256, 24
        %1297 = vbcast.lane.b32.xlu0 %v1283, %s1296
        %v1298 = vpop.permute.xlu0 %1297
        %v1299 = vlaneseq
        %v1300 = vshrl.u32 %v1299, 7
        %v1301 = vsub.s32 7, %v1300
        %v1302 = vrot.slane %v1165, %v1301
        %1304 = vbcast.lane.b32.xlu0 %v1302, 256
        %v1305 = vpop.permute.xlu0 %1304
        %s1307 = sor.u32 256, 8
        %1308 = vbcast.lane.b32.xlu0 %v1302, %s1307
        %v1309 = vpop.permute.xlu0 %1308
        %s1311 = sor.u32 256, 16
        %1312 = vbcast.lane.b32.xlu0 %v1302, %s1311
        %v1313 = vpop.permute.xlu0 %1312
        %s1315 = sor.u32 256, 24
        %1316 = vbcast.lane.b32.xlu0 %v1302, %s1315
        %v1317 = vpop.permute.xlu0 %1316
        %vm1318 = vcmp.gt.f32.partialorder %v1172, 0.5
        %vm1319 = vcmp.gt.f32.partialorder %v1176, 0.5
        %vm1320 = vcmp.gt.f32.partialorder %v1180, 0.5
        %vm1321 = vcmp.gt.f32.partialorder %v1184, 0.5
        %vm1322 = vcmp.gt.f32.partialorder %v1191, 0.5
        %vm1323 = vcmp.gt.f32.partialorder %v1195, 0.5
        %vm1324 = vcmp.gt.f32.partialorder %v1199, 0.5
        %vm1325 = vcmp.gt.f32.partialorder %v1203, 0.5
        %vm1326 = vcmp.gt.f32.partialorder %v1210, 0.5
        %vm1327 = vcmp.gt.f32.partialorder %v1214, 0.5
        %vm1328 = vcmp.gt.f32.partialorder %v1218, 0.5
        %vm1329 = vcmp.gt.f32.partialorder %v1222, 0.5
        %vm1330 = vcmp.gt.f32.partialorder %v1229, 0.5
        %vm1331 = vcmp.gt.f32.partialorder %v1233, 0.5
        %vm1332 = vcmp.gt.f32.partialorder %v1237, 0.5
        %vm1333 = vcmp.gt.f32.partialorder %v1241, 0.5
        %vm1334 = vcmp.gt.f32.partialorder %v1248, 0.5
        %vm1335 = vcmp.gt.f32.partialorder %v1252, 0.5
        %vm1336 = vcmp.gt.f32.partialorder %v1256, 0.5
        %vm1337 = vcmp.gt.f32.partialorder %v1260, 0.5
        %vm1338 = vcmp.gt.f32.partialorder %v1267, 0.5
        %vm1339 = vcmp.gt.f32.partialorder %v1271, 0.5
        %vm1340 = vcmp.gt.f32.partialorder %v1275, 0.5
        %vm1341 = vcmp.gt.f32.partialorder %v1279, 0.5
        %vm1342 = vcmp.gt.f32.partialorder %v1286, 0.5
        %vm1343 = vcmp.gt.f32.partialorder %v1290, 0.5
        %vm1344 = vcmp.gt.f32.partialorder %v1294, 0.5
        %vm1345 = vcmp.gt.f32.partialorder %v1298, 0.5
        %vm1346 = vcmp.gt.f32.partialorder %v1305, 0.5
        %vm1347 = vcmp.gt.f32.partialorder %v1309, 0.5
        %vm1348 = vcmp.gt.f32.partialorder %v1313, 0.5
        %vm1349 = vcmp.gt.f32.partialorder %v1317, 0.5
        %v1350 = vsel %vm1318, 1, 0
        %v1351 = vsel %vm1319, 1, 0
        %v1352 = vsel %vm1320, 1, 0
        %v1353 = vsel %vm1321, 1, 0
        %v1354 = vsel %vm1322, 1, 0
        %v1355 = vsel %vm1323, 1, 0
        %v1356 = vsel %vm1324, 1, 0
        %v1357 = vsel %vm1325, 1, 0
        %v1358 = vsel %vm1326, 1, 0
        %v1359 = vsel %vm1327, 1, 0
        %v1360 = vsel %vm1328, 1, 0
        %v1361 = vsel %vm1329, 1, 0
        %v1362 = vsel %vm1330, 1, 0
        %v1363 = vsel %vm1331, 1, 0
        %v1364 = vsel %vm1332, 1, 0
        %v1365 = vsel %vm1333, 1, 0
        %v1366 = vsel %vm1334, 1, 0
        %v1367 = vsel %vm1335, 1, 0
        %v1368 = vsel %vm1336, 1, 0
        %v1369 = vsel %vm1337, 1, 0
        %v1370 = vsel %vm1338, 1, 0
        %v1371 = vsel %vm1339, 1, 0
        %v1372 = vsel %vm1340, 1, 0
        %v1373 = vsel %vm1341, 1, 0
        %v1374 = vsel %vm1342, 1, 0
        %v1375 = vsel %vm1343, 1, 0
        %v1376 = vsel %vm1344, 1, 0
        %v1377 = vsel %vm1345, 1, 0
        %v1378 = vsel %vm1346, 1, 0
        %v1379 = vsel %vm1347, 1, 0
        %v1380 = vsel %vm1348, 1, 0
        %v1381 = vsel %vm1349, 1, 0
        %vm1382 = vcmp.eq.s32.totalorder %v1350, 1
        %vm1383 = vcmp.eq.s32.totalorder %v1351, 1
        %vm1384 = vcmp.eq.s32.totalorder %v1352, 1
        %vm1385 = vcmp.eq.s32.totalorder %v1353, 1
        %vm1386 = vcmp.eq.s32.totalorder %v1354, 1
        %vm1387 = vcmp.eq.s32.totalorder %v1355, 1
        %vm1388 = vcmp.eq.s32.totalorder %v1356, 1
        %vm1389 = vcmp.eq.s32.totalorder %v1357, 1
        %vm1390 = vcmp.eq.s32.totalorder %v1358, 1
        %vm1391 = vcmp.eq.s32.totalorder %v1359, 1
        %vm1392 = vcmp.eq.s32.totalorder %v1360, 1
        %vm1393 = vcmp.eq.s32.totalorder %v1361, 1
        %vm1394 = vcmp.eq.s32.totalorder %v1362, 1
        %vm1395 = vcmp.eq.s32.totalorder %v1363, 1
        %vm1396 = vcmp.eq.s32.totalorder %v1364, 1
        %vm1397 = vcmp.eq.s32.totalorder %v1365, 1
        %vm1398 = vcmp.eq.s32.totalorder %v1366, 1
        %vm1399 = vcmp.eq.s32.totalorder %v1367, 1
        %vm1400 = vcmp.eq.s32.totalorder %v1368, 1
        %vm1401 = vcmp.eq.s32.totalorder %v1369, 1
        %vm1402 = vcmp.eq.s32.totalorder %v1370, 1
        %vm1403 = vcmp.eq.s32.totalorder %v1371, 1
        %vm1404 = vcmp.eq.s32.totalorder %v1372, 1
        %vm1405 = vcmp.eq.s32.totalorder %v1373, 1
        %vm1406 = vcmp.eq.s32.totalorder %v1374, 1
        %vm1407 = vcmp.eq.s32.totalorder %v1375, 1
        %vm1408 = vcmp.eq.s32.totalorder %v1376, 1
        %vm1409 = vcmp.eq.s32.totalorder %v1377, 1
        %vm1410 = vcmp.eq.s32.totalorder %v1378, 1
        %vm1411 = vcmp.eq.s32.totalorder %v1379, 1
        %vm1412 = vcmp.eq.s32.totalorder %v1380, 1
        %vm1413 = vcmp.eq.s32.totalorder %v1381, 1
        %v1414 = vsel %vm1382, %v1133, -1e+30
        %v1415 = vsel %vm1383, %v1134, -1e+30
        %v1416 = vsel %vm1384, %v1135, -1e+30
        %v1417 = vsel %vm1385, %v1136, -1e+30
        %v1418 = vsel %vm1386, %v1137, -1e+30
        %v1419 = vsel %vm1387, %v1138, -1e+30
        %v1420 = vsel %vm1388, %v1139, -1e+30
        %v1421 = vsel %vm1389, %v1140, -1e+30
        %v1422 = vsel %vm1390, %v1141, -1e+30
        %v1423 = vsel %vm1391, %v1142, -1e+30
        %v1424 = vsel %vm1392, %v1143, -1e+30
        %v1425 = vsel %vm1393, %v1144, -1e+30
        %v1426 = vsel %vm1394, %v1145, -1e+30
        %v1427 = vsel %vm1395, %v1146, -1e+30
        %v1428 = vsel %vm1396, %v1147, -1e+30
        %v1429 = vsel %vm1397, %v1148, -1e+30
        %v1430 = vsel %vm1398, %v1149, -1e+30
        %v1431 = vsel %vm1399, %v1150, -1e+30
        %v1432 = vsel %vm1400, %v1151, -1e+30
        %v1433 = vsel %vm1401, %v1152, -1e+30
        %v1434 = vsel %vm1402, %v1153, -1e+30
        %v1435 = vsel %vm1403, %v1154, -1e+30
        %v1436 = vsel %vm1404, %v1155, -1e+30
        %v1437 = vsel %vm1405, %v1156, -1e+30
        %v1438 = vsel %vm1406, %v1157, -1e+30
        %v1439 = vsel %vm1407, %v1158, -1e+30
        %v1440 = vsel %vm1408, %v1159, -1e+30
        %v1441 = vsel %vm1409, %v1160, -1e+30
        %v1442 = vsel %vm1410, %v1161, -1e+30
        %v1443 = vsel %vm1411, %v1162, -1e+30
        %v1444 = vsel %vm1412, %v1163, -1e+30
        %v1445 = vsel %vm1413, %v1164, -1e+30
        %v1446 = vsel %vm845, %v1414, -inf
        %v1447 = vsel %vm845, %v1415, -inf
        %v1448 = vmax.f32 %v1446, %v1447
        %v1449 = vsel %vm845, %v1416, -inf
        %v1450 = vmax.f32 %v1448, %v1449
        %v1451 = vsel %vm845, %v1417, -inf
        %v1452 = vmax.f32 %v1450, %v1451
        %v1453 = vrot.slane %v1452, 4
        %v1454 = vmax.f32 %v1452, %v1453
        %v1455 = vrot.slane %v1454, 2
        %v1456 = vmax.f32 %v1454, %v1455
        %v1457 = vrot.slane %v1456, 1
        %v1458 = vmax.f32 %v1456, %v1457
        %v1459 = vsel %vm845, %v1418, -inf
        %v1460 = vsel %vm845, %v1419, -inf
        %v1461 = vmax.f32 %v1459, %v1460
        %v1462 = vsel %vm845, %v1420, -inf
        %v1463 = vmax.f32 %v1461, %v1462
        %v1464 = vsel %vm845, %v1421, -inf
        %v1465 = vmax.f32 %v1463, %v1464
        %v1466 = vrot.slane %v1465, 4
        %v1467 = vmax.f32 %v1465, %v1466
        %v1468 = vrot.slane %v1467, 2
        %v1469 = vmax.f32 %v1467, %v1468
        %v1470 = vrot.slane %v1469, 1
        %v1471 = vmax.f32 %v1469, %v1470
        %v1472 = vsel %vm845, %v1422, -inf
        %v1473 = vsel %vm845, %v1423, -inf
        %v1474 = vmax.f32 %v1472, %v1473
        %v1475 = vsel %vm845, %v1424, -inf
        %v1476 = vmax.f32 %v1474, %v1475
        %v1477 = vsel %vm845, %v1425, -inf
        %v1478 = vmax.f32 %v1476, %v1477
        %v1479 = vrot.slane %v1478, 4
        %v1480 = vmax.f32 %v1478, %v1479
        %v1481 = vrot.slane %v1480, 2
        %v1482 = vmax.f32 %v1480, %v1481
        %v1483 = vrot.slane %v1482, 1
        %v1484 = vmax.f32 %v1482, %v1483
        %v1485 = vsel %vm845, %v1426, -inf
        %v1486 = vsel %vm845, %v1427, -inf
        %v1487 = vmax.f32 %v1485, %v1486
        %v1488 = vsel %vm845, %v1428, -inf
        %v1489 = vmax.f32 %v1487, %v1488
        %v1490 = vsel %vm845, %v1429, -inf
        %v1491 = vmax.f32 %v1489, %v1490
        %v1492 = vrot.slane %v1491, 4
        %v1493 = vmax.f32 %v1491, %v1492
        %v1494 = vrot.slane %v1493, 2
        %v1495 = vmax.f32 %v1493, %v1494
        %v1496 = vrot.slane %v1495, 1
        %v1497 = vmax.f32 %v1495, %v1496
        %v1498 = vsel %vm845, %v1430, -inf
        %v1499 = vsel %vm845, %v1431, -inf
        %v1500 = vmax.f32 %v1498, %v1499
        %v1501 = vsel %vm845, %v1432, -inf
        %v1502 = vmax.f32 %v1500, %v1501
        %v1503 = vsel %vm845, %v1433, -inf
        %v1504 = vmax.f32 %v1502, %v1503
        %v1505 = vrot.slane %v1504, 4
        %v1506 = vmax.f32 %v1504, %v1505
        %v1507 = vrot.slane %v1506, 2
        %v1508 = vmax.f32 %v1506, %v1507
        %v1509 = vrot.slane %v1508, 1
        %v1510 = vmax.f32 %v1508, %v1509
        %v1511 = vsel %vm845, %v1434, -inf
        %v1512 = vsel %vm845, %v1435, -inf
        %v1513 = vmax.f32 %v1511, %v1512
        %v1514 = vsel %vm845, %v1436, -inf
        %v1515 = vmax.f32 %v1513, %v1514
        %v1516 = vsel %vm845, %v1437, -inf
        %v1517 = vmax.f32 %v1515, %v1516
        %v1518 = vrot.slane %v1517, 4
        %v1519 = vmax.f32 %v1517, %v1518
        %v1520 = vrot.slane %v1519, 2
        %v1521 = vmax.f32 %v1519, %v1520
        %v1522 = vrot.slane %v1521, 1
        %v1523 = vmax.f32 %v1521, %v1522
        %v1524 = vsel %vm845, %v1438, -inf
        %v1525 = vsel %vm845, %v1439, -inf
        %v1526 = vmax.f32 %v1524, %v1525
        %v1527 = vsel %vm845, %v1440, -inf
        %v1528 = vmax.f32 %v1526, %v1527
        %v1529 = vsel %vm845, %v1441, -inf
        %v1530 = vmax.f32 %v1528, %v1529
        %v1531 = vrot.slane %v1530, 4
        %v1532 = vmax.f32 %v1530, %v1531
        %v1533 = vrot.slane %v1532, 2
        %v1534 = vmax.f32 %v1532, %v1533
        %v1535 = vrot.slane %v1534, 1
        %v1536 = vmax.f32 %v1534, %v1535
        %v1537 = vsel %vm845, %v1442, -inf
        %v1538 = vsel %vm845, %v1443, -inf
        %v1539 = vmax.f32 %v1537, %v1538
        %v1540 = vsel %vm845, %v1444, -inf
        %v1541 = vmax.f32 %v1539, %v1540
        %v1542 = vsel %vm845, %v1445, -inf
        %v1543 = vmax.f32 %v1541, %v1542
        %v1544 = vrot.slane %v1543, 4
        %v1545 = vmax.f32 %v1543, %v1544
        %v1546 = vrot.slane %v1545, 2
        %v1547 = vmax.f32 %v1545, %v1546
        %v1548 = vrot.slane %v1547, 1
        %v1549 = vmax.f32 %v1547, %v1548
        %vm1558 = vcmask 1041409
        %v1559 = vsel %vm1558, %v1471, %v1458
        %vm1560 = vcmask 1042434
        %v1561 = vsel %vm1560, %v1484, %v1559
        %vm1562 = vcmask 1043459
        %v1563 = vsel %vm1562, %v1497, %v1561
        %vm1564 = vcmask 1044484
        %v1565 = vsel %vm1564, %v1510, %v1563
        %vm1566 = vcmask 1045509
        %v1567 = vsel %vm1566, %v1523, %v1565
        %vm1568 = vcmask 1046534
        %v1569 = vsel %vm1568, %v1536, %v1567
        %vm1570 = vcmask 1047559
        %v1571 = vsel %vm1570, %v1549, %v1569
        %1573 = vst.msk [vmem:[%s437] sm:$0xff] %vm845, %v1571
        %s1574 = sand.u32 %s217, 1
        %s1575 = scalar_lea.sflag [#allocation4], %s1574
        %s1576 = sand.u32 %s217, 1
        %s1577 = smul.addr %s1576, 8
        %s1578 = scalar_lea.vmem [#allocation16], %s1577
        // Predicated region
        $region85: #{tpu_custom_call.1} parent=51 // pred_check
          %p1579 = pneg %p227
        $region86: #{tpu_custom_call.1} parent=51 // pred_check_branch
          %1581 = sbr.rel (%p1579) target = $region88
        $region87: #{tpu_custom_call.1} parent=51 // pred_region
          %s1583 = ssub.s32 128, 128
          %1584 = vsyncadd %s1575, %s1583
          %s1585 = smul.addr %s31, 128
          %s1586 = scalar_lea.hbm %s8, %s1585
          %s1588 = sshll.u32 %s1578, 4
          %s1589 = int_to_ptr.vmem [resolvable:$true] %s1588
          %1591 = dma.vmem_to_hbm [thread:$0]  %s1589, 128, %s1586, %s1575
        $region88: #{tpu_custom_call.1} parent=51 // pred_fallthru
          _
      $region52: #{tpu_custom_call.1} parent=5 // pred_fallthru
        _
      %p1592 = scmp.le.s32.totalorder 2, %s26
      // Predicated region
      $region89: #{tpu_custom_call.1} parent=5 // pred_check
        %p1593 = pneg %p1592
      $region90: #{tpu_custom_call.1} parent=5 // pred_check_branch
        %1595 = sbr.rel (%p1593) target = $region92
      $region91: #{tpu_custom_call.1} parent=5 // pred_region
        %s1596 = ssub.s32 %s26, 2
        // Predicated region
        $region93: #{tpu_custom_call.1} parent=91 // pred_check
          %p1597 = pneg %p233
        $region94: #{tpu_custom_call.1} parent=91 // pred_check_branch
          %1599 = sbr.rel (%p1597) target = $region96
        $region95: #{tpu_custom_call.1} parent=91 // pred_region
          %s1600 = sand.u32 %s218, 1
          %s1601 = scalar_lea.sflag [#allocation4], %s1600
          %s1602 = sand.u32 %s218, 1
          %s1603 = smul.addr %s1602, 8
          %s1604 = scalar_lea.vmem [#allocation16], %s1603
          %1605 = dma.done %s1601, 128
        $region96: #{tpu_custom_call.1} parent=91 // pred_fallthru
          _
      $region92: #{tpu_custom_call.1} parent=5 // pred_fallthru
        _
    $region6: #{tpu_custom_call.1} parent=1 // loop_footer
      %s30 = sadd.s32 1, %s26
    $region7: #{tpu_custom_call.1} parent=1 // loop_footer_branch
      %25 = sbr.rel target = $region3
    $region8: #{tpu_custom_call.1} parent=1 // loop_exit
      _
    %1606 = vsyncpa [#allocation3], 1
    %s1607 = scalar_lea.sflag [#allocation3], 1
    %1608 = vsyncpa %s1607, 1
    %1609 = vsyncpa [#allocation6], 1
    %s1610 = scalar_lea.sflag [#allocation6], 1
    %1611 = vsyncpa %s1610, 1
    %1612 = vsyncpa [#allocation9], 1
    %1613 = vsyncpa [#allocation12], 1
    %1614 = vsyncpa [#allocation15], 1
    %1615 = vsyncpa [#allocation4], 1
    %s1616 = scalar_lea.sflag [#allocation4], 1
    %1617 = vsyncpa %s1616, 1

</llo_original>
